<compile_context>
chip_gen: v6e
topology: v6e:2x2x1
jax: 0.10.0
libtpu: 0.0.40
codegen_flags: <defaults>
</compile_context>

<pallas_src>
import math
import functools

import jax
import jax.numpy as jnp
from jax import lax
from jax.experimental import pallas as pl
from jax.experimental.pallas import tpu as pltpu


def _attn_kernel(q_ref, k_ref, v_ref, kpm_ref, am_ref,
                 wq_ref, bq_ref, wk_ref, bk_ref, wv_ref, bv_ref,
                 wo_ref, bo_ref, o_ref, *, n_head):
    f32 = jnp.float32
    bf16 = jnp.bfloat16
    neg = jnp.finfo(f32).min

    # Cast activations to bf16 once; MXU runs bf16 at 2-4x the f32 rate.
    q = q_ref[0].astype(bf16)          # (TL, C)
    k = k_ref[0].astype(bf16)          # (S, C)
    v = v_ref[0].astype(bf16)          # (S, C)

    # Combined additive mask bias, built once (it is head-invariant).
    kpm = kpm_ref[0].astype(f32)       # (1, S)  nonzero == masked
    am = am_ref[...].astype(f32)       # (TL, S) nonzero == masked
    masked = jnp.maximum(kpm, am)      # (TL, S), > 0 where masked
    mask_bias = jnp.where(masked > 0.0, neg, jnp.zeros_like(masked))

    acc = None
    # Static loop over heads; weights are pre-split so there is no in-kernel
    # column slicing or concatenation of head outputs.
    for h in range(n_head):
        qh = jnp.dot(q, wq_ref[h], preferred_element_type=f32) + bq_ref[h]  # (TL,Dh)
        kh = jnp.dot(k, wk_ref[h], preferred_element_type=f32) + bk_ref[h]  # (S, Dh)
        vh = jnp.dot(v, wv_ref[h], preferred_element_type=f32) + bv_ref[h]  # (S, Dh)

        # Scores: contract the last dims directly (no explicit kh.T).
        att = lax.dot_general(
            qh.astype(bf16), kh.astype(bf16),
            (((1,), (1,)), ((), ())),
            preferred_element_type=f32)            # (TL, S)
        att = att + mask_bias                      # scale already folded in Wq

        # Numerically-stable softmax in f32; the divide goes to the EUP.
        att = att - jnp.max(att, axis=-1, keepdims=True)
        p = jnp.exp(att)
        p = p * pl.reciprocal(jnp.sum(p, axis=-1, keepdims=True), approx=True)

        yh = jnp.dot(p.astype(bf16), vh.astype(bf16),
                     preferred_element_type=f32)   # (TL, Dh)
        yo = jnp.dot(yh.astype(bf16), wo_ref[h],
                     preferred_element_type=f32)   # (TL, C)
        acc = yo if acc is None else acc + yo

    o_ref[0] = (acc + bo_ref[...]).astype(o_ref.dtype)


def scaled_dot_product_attention(query, key, value, params,
                                 key_padding_mask=None, attention_mask=None,
                                 *, n_head, q_tile=128):
    """query: (B,L,C), key/value: (B,S,C). Returns (B,L,C)."""
    B, L, C = query.shape
    S = key.shape[1]
    Dh = C // n_head
    scale = 1.0 / math.sqrt(Dh)
    bf16 = jnp.bfloat16

    # int8 masks: 4x less DMA / VMEM than int32 at DETR scale.
    if key_padding_mask is None:
        kpm = jnp.zeros((B, 1, S), dtype=jnp.int8)
    else:
        kpm = key_padding_mask.astype(jnp.int8).reshape(B, 1, S)
    if attention_mask is None:
        am = jnp.zeros((L, S), dtype=jnp.int8)
    else:
        am = attention_mask.astype(jnp.int8)

    # torch weights are (out, in); y = x @ W.T + b.  Pre-split per head and
    # fold the attention scale into Wq / bq; cast weights to bf16 on the host.
    def split_w(w, s=1.0):
        return (w.T * s).reshape(C, n_head, Dh).transpose(1, 0, 2).astype(bf16)

    def split_b(b, s=1.0):
        return (b * s).reshape(n_head, 1, Dh).astype(jnp.float32)

    wq3, bq3 = split_w(params["wq"], scale), split_b(params["bq"], scale)
    wk3, bk3 = split_w(params["wk"]), split_b(params["bk"])
    wv3, bv3 = split_w(params["wv"]), split_b(params["bv"])
    wo3 = params["wo"].T.reshape(n_head, Dh, C).astype(bf16)   # (H, Dh, C)
    bo = params["bo"].reshape(1, C).astype(jnp.float32)

    TL = min(L, q_tile)
    n_l = pl.cdiv(L, TL)

    kernel = functools.partial(_attn_kernel, n_head=n_head)

    # Constant index maps -> weights never re-DMA across grid steps.
    # (For very large C one could additionally single-buffer them.)
    w_spec = pl.BlockSpec((n_head, C, Dh), lambda b, l: (0, 0, 0))
    b_spec = pl.BlockSpec((n_head, 1, Dh), lambda b, l: (0, 0, 0))

    return pl.pallas_call(
        kernel,
        out_shape=jax.ShapeDtypeStruct((B, L, C), query.dtype),
        grid_spec=pltpu.PrefetchScalarGridSpec(
            num_scalar_prefetch=0,
            grid=(B, n_l),
            in_specs=[
                pl.BlockSpec((1, TL, C), lambda b, l: (b, l, 0)),   # query
                pl.BlockSpec((1, S, C), lambda b, l: (b, 0, 0)),    # key
                pl.BlockSpec((1, S, C), lambda b, l: (b, 0, 0)),    # value
                pl.BlockSpec((1, 1, S), lambda b, l: (b, 0, 0)),    # key_padding_mask
                pl.BlockSpec((TL, S), lambda b, l: (l, 0)),         # attention_mask
                w_spec, b_spec,                                     # Wq, bq (scaled)
                w_spec, b_spec,                                     # Wk, bk
                w_spec, b_spec,                                     # Wv, bv
                pl.BlockSpec((n_head, Dh, C), lambda b, l: (0, 0, 0)),  # Wo
                pl.BlockSpec((1, C), lambda b, l: (0, 0)),          # bo
            ],
            out_specs=pl.BlockSpec((1, TL, C), lambda b, l: (b, l, 0)),
        ),
        compiler_params=pltpu.CompilerParams(
            dimension_semantics=("parallel", "parallel")),
    )(query, key, value, kpm, am,
      wq3, bq3, wk3, bk3, wv3, bv3, wo3, bo)


def _reference(query, key, value, params, key_padding_mask, attention_mask, n_head):
    B, L, C = query.shape
    S = key.shape[1]
    Dh = C // n_head
    qp = query @ params["wq"].T + params["bq"]
    kp = key @ params["wk"].T + params["bk"]
    vp = value @ params["wv"].T + params["bv"]
    q = qp.reshape(B, L, n_head, Dh).transpose(0, 2, 1, 3)
    k = kp.reshape(B, S, n_head, Dh).transpose(0, 2, 1, 3)
    v = vp.reshape(B, S, n_head, Dh).transpose(0, 2, 1, 3)
    att = jnp.einsum("bhld,bhsd->bhls", q, k) / math.sqrt(Dh)
    neg = jnp.finfo(att.dtype).min
    att = jnp.where(key_padding_mask[:, None, None, :], neg, att)
    att = jnp.where(attention_mask[None, None, :, :], neg, att)
    att = jax.nn.softmax(att, axis=-1)
    y = jnp.einsum("bhls,bhsd->bhld", att, v)
    y = y.transpose(0, 2, 1, 3).reshape(B, L, C)
    return y @ params["wo"].T + params["bo"]


if __name__ == "__main__":
    # Small config consistent with the module: hidden=32, heads=4, head_size=8.
    B, L, S, C, H = 2, 8, 8, 32, 4

    key0 = jax.random.PRNGKey(0)
    ks = jax.random.split(key0, 12)
    init = 0.02  # DETRConfig.initializer_range-style deterministic init

    params = {
        "wq": init * jax.random.normal(ks[0], (C, C), jnp.float32),
        "bq": init * jax.random.normal(ks[1], (C,), jnp.float32),
        "wk": init * jax.random.normal(ks[2], (C, C), jnp.float32),
        "bk": init * jax.random.normal(ks[3], (C,), jnp.float32),
        "wv": init * jax.random.normal(ks[4], (C, C), jnp.float32),
        "bv": init * jax.random.normal(ks[5], (C,), jnp.float32),
        "wo": init * jax.random.normal(ks[6], (C, C), jnp.float32),
        "bo": init * jax.random.normal(ks[7], (C,), jnp.float32),
    }

    query = jax.random.normal(ks[8], (B, L, C), jnp.float32)
    key_ = jax.random.normal(ks[9], (B, S, C), jnp.float32)
    value = jax.random.normal(ks[10], (B, S, C), jnp.float32)

    # Example masks: pad last 2 key positions of batch 1; causal attention mask.
    key_padding_mask = jnp.zeros((B, S), dtype=bool).at[1, -2:].set(True)
    attention_mask = jnp.triu(jnp.ones((L, S), dtype=bool), k=1)

    out = scaled_dot_product_attention(
        query, key_, value, params,
        key_padding_mask=key_padding_mask,
        attention_mask=attention_mask,
        n_head=H,
    )
    out = jax.block_until_ready(out)

    ref = _reference(query, key_, value, params,
                     key_padding_mask, attention_mask, H)
    assert out.shape == (B, L, C)
    # bf16 matmul operands + approx EUP reciprocal -> relaxed (but still
    # structure-catching) tolerance vs the exact f32 reference.
    assert jnp.allclose(out, ref, atol=3e-3, rtol=3e-3), (
        float(jnp.max(jnp.abs(out - ref))))

    print("KERNEL_OK")
</pallas_src>

<mosaic_0001>
module attributes {stable_mosaic.version = 11 : i64} {
  func.func @_attn_kernel(%arg0: i32, %arg1: i32, %arg2: memref<1x8x32xf32, #tpu.memory_space<vmem>>, %arg3: memref<1x8x32xf32, #tpu.memory_space<vmem>>, %arg4: memref<1x8x32xf32, #tpu.memory_space<vmem>>, %arg5: memref<1x1x8xi8, #tpu.memory_space<vmem>>, %arg6: memref<8x8xi8, #tpu.memory_space<vmem>>, %arg7: memref<4x32x8xbf16, #tpu.memory_space<vmem>>, %arg8: memref<4x1x8xf32, #tpu.memory_space<vmem>>, %arg9: memref<4x32x8xbf16, #tpu.memory_space<vmem>>, %arg10: memref<4x1x8xf32, #tpu.memory_space<vmem>>, %arg11: memref<4x32x8xbf16, #tpu.memory_space<vmem>>, %arg12: memref<4x1x8xf32, #tpu.memory_space<vmem>>, %arg13: memref<4x8x32xbf16, #tpu.memory_space<vmem>>, %arg14: memref<1x32xf32, #tpu.memory_space<vmem>>, %arg15: memref<1x8x32xf32, #tpu.memory_space<vmem>>) attributes {dimension_semantics = [#tpu.dimension_semantics<parallel>, #tpu.dimension_semantics<parallel>], iteration_bounds = array<i64: 2, 1>, scalar_prefetch = 0 : i64, scratch_operands = 0 : i64, tpu.core_type = #tpu.core_type<tc>, window_params = [{transform_indices = @transform_0, window_bounds = array<i64: 1, 8, 32>}, {transform_indices = @transform_1, window_bounds = array<i64: 1, 8, 32>}, {transform_indices = @transform_2, window_bounds = array<i64: 1, 8, 32>}, {transform_indices = @transform_3, window_bounds = array<i64: 1, 1, 8>}, {transform_indices = @transform_4, window_bounds = array<i64: 8, 8>}, {pipeline_mode = #tpu.pipeline_mode<synchronous>, transform_indices = @transform_5, window_bounds = array<i64: 4, 32, 8>}, {pipeline_mode = #tpu.pipeline_mode<synchronous>, transform_indices = @transform_6, window_bounds = array<i64: 4, 1, 8>}, {pipeline_mode = #tpu.pipeline_mode<synchronous>, transform_indices = @transform_7, window_bounds = array<i64: 4, 32, 8>}, {pipeline_mode = #tpu.pipeline_mode<synchronous>, transform_indices = @transform_8, window_bounds = array<i64: 4, 1, 8>}, {pipeline_mode = #tpu.pipeline_mode<synchronous>, transform_indices = @transform_9, window_bounds = array<i64: 4, 32, 8>}, {pipeline_mode = #tpu.pipeline_mode<synchronous>, transform_indices = @transform_10, window_bounds = array<i64: 4, 1, 8>}, {pipeline_mode = #tpu.pipeline_mode<synchronous>, transform_indices = @transform_11, window_bounds = array<i64: 4, 8, 32>}, {pipeline_mode = #tpu.pipeline_mode<synchronous>, transform_indices = @transform_12, window_bounds = array<i64: 1, 32>}, {transform_indices = @transform_13, window_bounds = array<i64: 1, 8, 32>}]} {
    %c0 = arith.constant 0 : index
    %c0_0 = arith.constant 0 : index
    %c0_1 = arith.constant 0 : index
    %0 = vector.load %arg2[%c0, %c0_0, %c0_1] : memref<1x8x32xf32, #tpu.memory_space<vmem>>, vector<1x8x32xf32>
    %1 = vector.shape_cast %0 : vector<1x8x32xf32> to vector<8x32xf32>
    %2 = arith.truncf %1 : vector<8x32xf32> to vector<8x32xbf16>
    %c0_2 = arith.constant 0 : index
    %c0_3 = arith.constant 0 : index
    %c0_4 = arith.constant 0 : index
    %3 = vector.load %arg3[%c0_2, %c0_3, %c0_4] : memref<1x8x32xf32, #tpu.memory_space<vmem>>, vector<1x8x32xf32>
    %4 = vector.shape_cast %3 : vector<1x8x32xf32> to vector<8x32xf32>
    %5 = arith.truncf %4 : vector<8x32xf32> to vector<8x32xbf16>
    %c0_5 = arith.constant 0 : index
    %c0_6 = arith.constant 0 : index
    %c0_7 = arith.constant 0 : index
    %6 = vector.load %arg4[%c0_5, %c0_6, %c0_7] : memref<1x8x32xf32, #tpu.memory_space<vmem>>, vector<1x8x32xf32>
    %7 = vector.shape_cast %6 : vector<1x8x32xf32> to vector<8x32xf32>
    %8 = arith.truncf %7 : vector<8x32xf32> to vector<8x32xbf16>
    %c0_8 = arith.constant 0 : index
    %c0_9 = arith.constant 0 : index
    %c0_10 = arith.constant 0 : index
    %9 = vector.load %arg5[%c0_8, %c0_9, %c0_10] : memref<1x1x8xi8, #tpu.memory_space<vmem>>, vector<1x1x8xi8>
    %10 = vector.shape_cast %9 : vector<1x1x8xi8> to vector<1x8xi8>
    %11 = arith.sitofp %10 : vector<1x8xi8> to vector<1x8xf32>
    %c0_11 = arith.constant 0 : index
    %c0_12 = arith.constant 0 : index
    %12 = vector.load %arg6[%c0_11, %c0_12] : memref<8x8xi8, #tpu.memory_space<vmem>>, vector<8x8xi8>
    %13 = arith.sitofp %12 : vector<8x8xi8> to vector<8x8xf32>
    %14 = vector.broadcast %11 : vector<1x8xf32> to vector<8x8xf32>
    %15 = arith.maximumf %14, %13 : vector<8x8xf32>
    %cst = arith.constant 0.000000e+00 : f32
    %16 = vector.broadcast %cst : f32 to vector<8x8xf32>
    %17 = arith.cmpf ogt, %15, %16 : vector<8x8xf32>
    %cst_13 = arith.constant 0.000000e+00 : f32
    %18 = vector.broadcast %cst_13 : f32 to vector<8x8xf32>
    %cst_14 = arith.constant -3.40282347E+38 : f32
    %19 = vector.broadcast %cst_14 : f32 to vector<8x8xf32>
    %20 = arith.select %17, %19, %18 : vector<8x8xi1>, vector<8x8xf32>
    %c0_15 = arith.constant 0 : index
    %c0_16 = arith.constant 0 : index
    %c0_17 = arith.constant 0 : index
    %21 = vector.load %arg7[%c0_15, %c0_16, %c0_17] : memref<4x32x8xbf16, #tpu.memory_space<vmem>>, vector<1x32x8xbf16>
    %22 = vector.shape_cast %21 : vector<1x32x8xbf16> to vector<32x8xbf16>
    %cst_18 = arith.constant dense<0.000000e+00> : vector<8x8xf32>
    %23 = tpu.matmul %2, %22, %cst_18 {dimension_numbers = #tpu.dot_dimension_numbers<[1], [0], [0], [1], [0, 0, 1, 1], [], []>} : vector<8x32xbf16>, vector<32x8xbf16>, vector<8x8xf32> -> vector<8x8xf32>
    %c0_19 = arith.constant 0 : index
    %c0_20 = arith.constant 0 : index
    %c0_21 = arith.constant 0 : index
    %24 = vector.load %arg8[%c0_19, %c0_20, %c0_21] : memref<4x1x8xf32, #tpu.memory_space<vmem>>, vector<1x1x8xf32>
    %25 = vector.shape_cast %24 : vector<1x1x8xf32> to vector<1x8xf32>
    %26 = vector.broadcast %25 : vector<1x8xf32> to vector<8x8xf32>
    %27 = arith.addf %23, %26 : vector<8x8xf32>
    %c0_22 = arith.constant 0 : index
    %c0_23 = arith.constant 0 : index
    %c0_24 = arith.constant 0 : index
    %28 = vector.load %arg9[%c0_22, %c0_23, %c0_24] : memref<4x32x8xbf16, #tpu.memory_space<vmem>>, vector<1x32x8xbf16>
    %29 = vector.shape_cast %28 : vector<1x32x8xbf16> to vector<32x8xbf16>
    %cst_25 = arith.constant dense<0.000000e+00> : vector<8x8xf32>
    %30 = tpu.matmul %5, %29, %cst_25 {dimension_numbers = #tpu.dot_dimension_numbers<[1], [0], [0], [1], [0, 0, 1, 1], [], []>} : vector<8x32xbf16>, vector<32x8xbf16>, vector<8x8xf32> -> vector<8x8xf32>
    %c0_26 = arith.constant 0 : index
    %c0_27 = arith.constant 0 : index
    %c0_28 = arith.constant 0 : index
    %31 = vector.load %arg10[%c0_26, %c0_27, %c0_28] : memref<4x1x8xf32, #tpu.memory_space<vmem>>, vector<1x1x8xf32>
    %32 = vector.shape_cast %31 : vector<1x1x8xf32> to vector<1x8xf32>
    %33 = vector.broadcast %32 : vector<1x8xf32> to vector<8x8xf32>
    %34 = arith.addf %30, %33 : vector<8x8xf32>
    %c0_29 = arith.constant 0 : index
    %c0_30 = arith.constant 0 : index
    %c0_31 = arith.constant 0 : index
    %35 = vector.load %arg11[%c0_29, %c0_30, %c0_31] : memref<4x32x8xbf16, #tpu.memory_space<vmem>>, vector<1x32x8xbf16>
    %36 = vector.shape_cast %35 : vector<1x32x8xbf16> to vector<32x8xbf16>
    %cst_32 = arith.constant dense<0.000000e+00> : vector<8x8xf32>
    %37 = tpu.matmul %8, %36, %cst_32 {dimension_numbers = #tpu.dot_dimension_numbers<[1], [0], [0], [1], [0, 0, 1, 1], [], []>} : vector<8x32xbf16>, vector<32x8xbf16>, vector<8x8xf32> -> vector<8x8xf32>
    %c0_33 = arith.constant 0 : index
    %c0_34 = arith.constant 0 : index
    %c0_35 = arith.constant 0 : index
    %38 = vector.load %arg12[%c0_33, %c0_34, %c0_35] : memref<4x1x8xf32, #tpu.memory_space<vmem>>, vector<1x1x8xf32>
    %39 = vector.shape_cast %38 : vector<1x1x8xf32> to vector<1x8xf32>
    %40 = vector.broadcast %39 : vector<1x8xf32> to vector<8x8xf32>
    %41 = arith.addf %37, %40 : vector<8x8xf32>
    %42 = arith.truncf %27 : vector<8x8xf32> to vector<8x8xbf16>
    %43 = arith.truncf %34 : vector<8x8xf32> to vector<8x8xbf16>
    %cst_36 = arith.constant dense<0.000000e+00> : vector<8x8xf32>
    %44 = tpu.matmul %42, %43, %cst_36 {dimension_numbers = #tpu.dot_dimension_numbers<[1], [1], [0], [0], [0, 0, 1, 0], [], []>} : vector<8x8xbf16>, vector<8x8xbf16>, vector<8x8xf32> -> vector<8x8xf32>
    %45 = arith.addf %44, %20 : vector<8x8xf32>
    %cst_37 = arith.constant dense<0xFF800000> : vector<8xf32>
    %46 = vector.multi_reduction <maximumf>, %45, %cst_37 [1] : vector<8x8xf32> to vector<8xf32>
    %47 = vector.shape_cast %46 : vector<8xf32> to vector<8x1xf32>
    %48 = vector.broadcast %47 : vector<8x1xf32> to vector<8x8xf32>
    %49 = arith.subf %45, %48 : vector<8x8xf32>
    %50 = math.exp %49 : vector<8x8xf32>
    %cst_38 = arith.constant dense<0.000000e+00> : vector<8xf32>
    %51 = vector.multi_reduction <add>, %50, %cst_38 [1] : vector<8x8xf32> to vector<8xf32>
    %52 = vector.shape_cast %51 : vector<8xf32> to vector<8x1xf32>
    %53 = tpu.reciprocal %52 {approx = true} : vector<8x1xf32> -> vector<8x1xf32>
    %54 = vector.broadcast %53 : vector<8x1xf32> to vector<8x8xf32>
    %55 = arith.mulf %50, %54 : vector<8x8xf32>
    %56 = arith.truncf %55 : vector<8x8xf32> to vector<8x8xbf16>
    %57 = arith.truncf %41 : vector<8x8xf32> to vector<8x8xbf16>
    %cst_39 = arith.constant dense<0.000000e+00> : vector<8x8xf32>
    %58 = tpu.matmul %56, %57, %cst_39 {dimension_numbers = #tpu.dot_dimension_numbers<[1], [0], [0], [1], [0, 0, 1, 1], [], []>} : vector<8x8xbf16>, vector<8x8xbf16>, vector<8x8xf32> -> vector<8x8xf32>
    %59 = arith.truncf %58 : vector<8x8xf32> to vector<8x8xbf16>
    %c0_40 = arith.constant 0 : index
    %c0_41 = arith.constant 0 : index
    %c0_42 = arith.constant 0 : index
    %60 = vector.load %arg13[%c0_40, %c0_41, %c0_42] : memref<4x8x32xbf16, #tpu.memory_space<vmem>>, vector<1x8x32xbf16>
    %61 = vector.shape_cast %60 : vector<1x8x32xbf16> to vector<8x32xbf16>
    %cst_43 = arith.constant dense<0.000000e+00> : vector<8x32xf32>
    %62 = tpu.matmul %59, %61, %cst_43 {dimension_numbers = #tpu.dot_dimension_numbers<[1], [0], [0], [1], [0, 0, 1, 1], [], []>} : vector<8x8xbf16>, vector<8x32xbf16>, vector<8x32xf32> -> vector<8x32xf32>
    %c1 = arith.constant 1 : index
    %c0_44 = arith.constant 0 : index
    %c0_45 = arith.constant 0 : index
    %63 = vector.load %arg7[%c1, %c0_44, %c0_45] : memref<4x32x8xbf16, #tpu.memory_space<vmem>>, vector<1x32x8xbf16>
    %64 = vector.shape_cast %63 : vector<1x32x8xbf16> to vector<32x8xbf16>
    %cst_46 = arith.constant dense<0.000000e+00> : vector<8x8xf32>
    %65 = tpu.matmul %2, %64, %cst_46 {dimension_numbers = #tpu.dot_dimension_numbers<[1], [0], [0], [1], [0, 0, 1, 1], [], []>} : vector<8x32xbf16>, vector<32x8xbf16>, vector<8x8xf32> -> vector<8x8xf32>
    %c1_47 = arith.constant 1 : index
    %c0_48 = arith.constant 0 : index
    %c0_49 = arith.constant 0 : index
    %66 = vector.load %arg8[%c1_47, %c0_48, %c0_49] : memref<4x1x8xf32, #tpu.memory_space<vmem>>, vector<1x1x8xf32>
    %67 = vector.shape_cast %66 : vector<1x1x8xf32> to vector<1x8xf32>
    %68 = vector.broadcast %67 : vector<1x8xf32> to vector<8x8xf32>
    %69 = arith.addf %65, %68 : vector<8x8xf32>
    %c1_50 = arith.constant 1 : index
    %c0_51 = arith.constant 0 : index
    %c0_52 = arith.constant 0 : index
    %70 = vector.load %arg9[%c1_50, %c0_51, %c0_52] : memref<4x32x8xbf16, #tpu.memory_space<vmem>>, vector<1x32x8xbf16>
    %71 = vector.shape_cast %70 : vector<1x32x8xbf16> to vector<32x8xbf16>
    %cst_53 = arith.constant dense<0.000000e+00> : vector<8x8xf32>
    %72 = tpu.matmul %5, %71, %cst_53 {dimension_numbers = #tpu.dot_dimension_numbers<[1], [0], [0], [1], [0, 0, 1, 1], [], []>} : vector<8x32xbf16>, vector<32x8xbf16>, vector<8x8xf32> -> vector<8x8xf32>
    %c1_54 = arith.constant 1 : index
    %c0_55 = arith.constant 0 : index
    %c0_56 = arith.constant 0 : index
    %73 = vector.load %arg10[%c1_54, %c0_55, %c0_56] : memref<4x1x8xf32, #tpu.memory_space<vmem>>, vector<1x1x8xf32>
    %74 = vector.shape_cast %73 : vector<1x1x8xf32> to vector<1x8xf32>
    %75 = vector.broadcast %74 : vector<1x8xf32> to vector<8x8xf32>
    %76 = arith.addf %72, %75 : vector<8x8xf32>
    %c1_57 = arith.constant 1 : index
    %c0_58 = arith.constant 0 : index
    %c0_59 = arith.constant 0 : index
    %77 = vector.load %arg11[%c1_57, %c0_58, %c0_59] : memref<4x32x8xbf16, #tpu.memory_space<vmem>>, vector<1x32x8xbf16>
    %78 = vector.shape_cast %77 : vector<1x32x8xbf16> to vector<32x8xbf16>
    %cst_60 = arith.constant dense<0.000000e+00> : vector<8x8xf32>
    %79 = tpu.matmul %8, %78, %cst_60 {dimension_numbers = #tpu.dot_dimension_numbers<[1], [0], [0], [1], [0, 0, 1, 1], [], []>} : vector<8x32xbf16>, vector<32x8xbf16>, vector<8x8xf32> -> vector<8x8xf32>
    %c1_61 = arith.constant 1 : index
    %c0_62 = arith.constant 0 : index
    %c0_63 = arith.constant 0 : index
    %80 = vector.load %arg12[%c1_61, %c0_62, %c0_63] : memref<4x1x8xf32, #tpu.memory_space<vmem>>, vector<1x1x8xf32>
    %81 = vector.shape_cast %80 : vector<1x1x8xf32> to vector<1x8xf32>
    %82 = vector.broadcast %81 : vector<1x8xf32> to vector<8x8xf32>
    %83 = arith.addf %79, %82 : vector<8x8xf32>
    %84 = arith.truncf %69 : vector<8x8xf32> to vector<8x8xbf16>
    %85 = arith.truncf %76 : vector<8x8xf32> to vector<8x8xbf16>
    %cst_64 = arith.constant dense<0.000000e+00> : vector<8x8xf32>
    %86 = tpu.matmul %84, %85, %cst_64 {dimension_numbers = #tpu.dot_dimension_numbers<[1], [1], [0], [0], [0, 0, 1, 0], [], []>} : vector<8x8xbf16>, vector<8x8xbf16>, vector<8x8xf32> -> vector<8x8xf32>
    %87 = arith.addf %86, %20 : vector<8x8xf32>
    %cst_65 = arith.constant dense<0xFF800000> : vector<8xf32>
    %88 = vector.multi_reduction <maximumf>, %87, %cst_65 [1] : vector<8x8xf32> to vector<8xf32>
    %89 = vector.shape_cast %88 : vector<8xf32> to vector<8x1xf32>
    %90 = vector.broadcast %89 : vector<8x1xf32> to vector<8x8xf32>
    %91 = arith.subf %87, %90 : vector<8x8xf32>
    %92 = math.exp %91 : vector<8x8xf32>
    %cst_66 = arith.constant dense<0.000000e+00> : vector<8xf32>
    %93 = vector.multi_reduction <add>, %92, %cst_66 [1] : vector<8x8xf32> to vector<8xf32>
    %94 = vector.shape_cast %93 : vector<8xf32> to vector<8x1xf32>
    %95 = tpu.reciprocal %94 {approx = true} : vector<8x1xf32> -> vector<8x1xf32>
    %96 = vector.broadcast %95 : vector<8x1xf32> to vector<8x8xf32>
    %97 = arith.mulf %92, %96 : vector<8x8xf32>
    %98 = arith.truncf %97 : vector<8x8xf32> to vector<8x8xbf16>
    %99 = arith.truncf %83 : vector<8x8xf32> to vector<8x8xbf16>
    %cst_67 = arith.constant dense<0.000000e+00> : vector<8x8xf32>
    %100 = tpu.matmul %98, %99, %cst_67 {dimension_numbers = #tpu.dot_dimension_numbers<[1], [0], [0], [1], [0, 0, 1, 1], [], []>} : vector<8x8xbf16>, vector<8x8xbf16>, vector<8x8xf32> -> vector<8x8xf32>
    %101 = arith.truncf %100 : vector<8x8xf32> to vector<8x8xbf16>
    %c1_68 = arith.constant 1 : index
    %c0_69 = arith.constant 0 : index
    %c0_70 = arith.constant 0 : index
    %102 = vector.load %arg13[%c1_68, %c0_69, %c0_70] : memref<4x8x32xbf16, #tpu.memory_space<vmem>>, vector<1x8x32xbf16>
    %103 = vector.shape_cast %102 : vector<1x8x32xbf16> to vector<8x32xbf16>
    %cst_71 = arith.constant dense<0.000000e+00> : vector<8x32xf32>
    %104 = tpu.matmul %101, %103, %cst_71 {dimension_numbers = #tpu.dot_dimension_numbers<[1], [0], [0], [1], [0, 0, 1, 1], [], []>} : vector<8x8xbf16>, vector<8x32xbf16>, vector<8x32xf32> -> vector<8x32xf32>
    %105 = arith.addf %62, %104 : vector<8x32xf32>
    %c2 = arith.constant 2 : index
    %c0_72 = arith.constant 0 : index
    %c0_73 = arith.constant 0 : index
    %106 = vector.load %arg7[%c2, %c0_72, %c0_73] : memref<4x32x8xbf16, #tpu.memory_space<vmem>>, vector<1x32x8xbf16>
    %107 = vector.shape_cast %106 : vector<1x32x8xbf16> to vector<32x8xbf16>
    %cst_74 = arith.constant dense<0.000000e+00> : vector<8x8xf32>
    %108 = tpu.matmul %2, %107, %cst_74 {dimension_numbers = #tpu.dot_dimension_numbers<[1], [0], [0], [1], [0, 0, 1, 1], [], []>} : vector<8x32xbf16>, vector<32x8xbf16>, vector<8x8xf32> -> vector<8x8xf32>
    %c2_75 = arith.constant 2 : index
    %c0_76 = arith.constant 0 : index
    %c0_77 = arith.constant 0 : index
    %109 = vector.load %arg8[%c2_75, %c0_76, %c0_77] : memref<4x1x8xf32, #tpu.memory_space<vmem>>, vector<1x1x8xf32>
    %110 = vector.shape_cast %109 : vector<1x1x8xf32> to vector<1x8xf32>
    %111 = vector.broadcast %110 : vector<1x8xf32> to vector<8x8xf32>
    %112 = arith.addf %108, %111 : vector<8x8xf32>
    %c2_78 = arith.constant 2 : index
    %c0_79 = arith.constant 0 : index
    %c0_80 = arith.constant 0 : index
    %113 = vector.load %arg9[%c2_78, %c0_79, %c0_80] : memref<4x32x8xbf16, #tpu.memory_space<vmem>>, vector<1x32x8xbf16>
    %114 = vector.shape_cast %113 : vector<1x32x8xbf16> to vector<32x8xbf16>
    %cst_81 = arith.constant dense<0.000000e+00> : vector<8x8xf32>
    %115 = tpu.matmul %5, %114, %cst_81 {dimension_numbers = #tpu.dot_dimension_numbers<[1], [0], [0], [1], [0, 0, 1, 1], [], []>} : vector<8x32xbf16>, vector<32x8xbf16>, vector<8x8xf32> -> vector<8x8xf32>
    %c2_82 = arith.constant 2 : index
    %c0_83 = arith.constant 0 : index
    %c0_84 = arith.constant 0 : index
    %116 = vector.load %arg10[%c2_82, %c0_83, %c0_84] : memref<4x1x8xf32, #tpu.memory_space<vmem>>, vector<1x1x8xf32>
    %117 = vector.shape_cast %116 : vector<1x1x8xf32> to vector<1x8xf32>
    %118 = vector.broadcast %117 : vector<1x8xf32> to vector<8x8xf32>
    %119 = arith.addf %115, %118 : vector<8x8xf32>
    %c2_85 = arith.constant 2 : index
    %c0_86 = arith.constant 0 : index
    %c0_87 = arith.constant 0 : index
    %120 = vector.load %arg11[%c2_85, %c0_86, %c0_87] : memref<4x32x8xbf16, #tpu.memory_space<vmem>>, vector<1x32x8xbf16>
    %121 = vector.shape_cast %120 : vector<1x32x8xbf16> to vector<32x8xbf16>
    %cst_88 = arith.constant dense<0.000000e+00> : vector<8x8xf32>
    %122 = tpu.matmul %8, %121, %cst_88 {dimension_numbers = #tpu.dot_dimension_numbers<[1], [0], [0], [1], [0, 0, 1, 1], [], []>} : vector<8x32xbf16>, vector<32x8xbf16>, vector<8x8xf32> -> vector<8x8xf32>
    %c2_89 = arith.constant 2 : index
    %c0_90 = arith.constant 0 : index
    %c0_91 = arith.constant 0 : index
    %123 = vector.load %arg12[%c2_89, %c0_90, %c0_91] : memref<4x1x8xf32, #tpu.memory_space<vmem>>, vector<1x1x8xf32>
    %124 = vector.shape_cast %123 : vector<1x1x8xf32> to vector<1x8xf32>
    %125 = vector.broadcast %124 : vector<1x8xf32> to vector<8x8xf32>
    %126 = arith.addf %122, %125 : vector<8x8xf32>
    %127 = arith.truncf %112 : vector<8x8xf32> to vector<8x8xbf16>
    %128 = arith.truncf %119 : vector<8x8xf32> to vector<8x8xbf16>
    %cst_92 = arith.constant dense<0.000000e+00> : vector<8x8xf32>
    %129 = tpu.matmul %127, %128, %cst_92 {dimension_numbers = #tpu.dot_dimension_numbers<[1], [1], [0], [0], [0, 0, 1, 0], [], []>} : vector<8x8xbf16>, vector<8x8xbf16>, vector<8x8xf32> -> vector<8x8xf32>
    %130 = arith.addf %129, %20 : vector<8x8xf32>
    %cst_93 = arith.constant dense<0xFF800000> : vector<8xf32>
    %131 = vector.multi_reduction <maximumf>, %130, %cst_93 [1] : vector<8x8xf32> to vector<8xf32>
    %132 = vector.shape_cast %131 : vector<8xf32> to vector<8x1xf32>
    %133 = vector.broadcast %132 : vector<8x1xf32> to vector<8x8xf32>
    %134 = arith.subf %130, %133 : vector<8x8xf32>
    %135 = math.exp %134 : vector<8x8xf32>
    %cst_94 = arith.constant dense<0.000000e+00> : vector<8xf32>
    %136 = vector.multi_reduction <add>, %135, %cst_94 [1] : vector<8x8xf32> to vector<8xf32>
    %137 = vector.shape_cast %136 : vector<8xf32> to vector<8x1xf32>
    %138 = tpu.reciprocal %137 {approx = true} : vector<8x1xf32> -> vector<8x1xf32>
    %139 = vector.broadcast %138 : vector<8x1xf32> to vector<8x8xf32>
    %140 = arith.mulf %135, %139 : vector<8x8xf32>
    %141 = arith.truncf %140 : vector<8x8xf32> to vector<8x8xbf16>
    %142 = arith.truncf %126 : vector<8x8xf32> to vector<8x8xbf16>
    %cst_95 = arith.constant dense<0.000000e+00> : vector<8x8xf32>
    %143 = tpu.matmul %141, %142, %cst_95 {dimension_numbers = #tpu.dot_dimension_numbers<[1], [0], [0], [1], [0, 0, 1, 1], [], []>} : vector<8x8xbf16>, vector<8x8xbf16>, vector<8x8xf32> -> vector<8x8xf32>
    %144 = arith.truncf %143 : vector<8x8xf32> to vector<8x8xbf16>
    %c2_96 = arith.constant 2 : index
    %c0_97 = arith.constant 0 : index
    %c0_98 = arith.constant 0 : index
    %145 = vector.load %arg13[%c2_96, %c0_97, %c0_98] : memref<4x8x32xbf16, #tpu.memory_space<vmem>>, vector<1x8x32xbf16>
    %146 = vector.shape_cast %145 : vector<1x8x32xbf16> to vector<8x32xbf16>
    %cst_99 = arith.constant dense<0.000000e+00> : vector<8x32xf32>
    %147 = tpu.matmul %144, %146, %cst_99 {dimension_numbers = #tpu.dot_dimension_numbers<[1], [0], [0], [1], [0, 0, 1, 1], [], []>} : vector<8x8xbf16>, vector<8x32xbf16>, vector<8x32xf32> -> vector<8x32xf32>
    %148 = arith.addf %105, %147 : vector<8x32xf32>
    %c3 = arith.constant 3 : index
    %c0_100 = arith.constant 0 : index
    %c0_101 = arith.constant 0 : index
    %149 = vector.load %arg7[%c3, %c0_100, %c0_101] : memref<4x32x8xbf16, #tpu.memory_space<vmem>>, vector<1x32x8xbf16>
    %150 = vector.shape_cast %149 : vector<1x32x8xbf16> to vector<32x8xbf16>
    %cst_102 = arith.constant dense<0.000000e+00> : vector<8x8xf32>
    %151 = tpu.matmul %2, %150, %cst_102 {dimension_numbers = #tpu.dot_dimension_numbers<[1], [0], [0], [1], [0, 0, 1, 1], [], []>} : vector<8x32xbf16>, vector<32x8xbf16>, vector<8x8xf32> -> vector<8x8xf32>
    %c3_103 = arith.constant 3 : index
    %c0_104 = arith.constant 0 : index
    %c0_105 = arith.constant 0 : index
    %152 = vector.load %arg8[%c3_103, %c0_104, %c0_105] : memref<4x1x8xf32, #tpu.memory_space<vmem>>, vector<1x1x8xf32>
    %153 = vector.shape_cast %152 : vector<1x1x8xf32> to vector<1x8xf32>
    %154 = vector.broadcast %153 : vector<1x8xf32> to vector<8x8xf32>
    %155 = arith.addf %151, %154 : vector<8x8xf32>
    %c3_106 = arith.constant 3 : index
    %c0_107 = arith.constant 0 : index
    %c0_108 = arith.constant 0 : index
    %156 = vector.load %arg9[%c3_106, %c0_107, %c0_108] : memref<4x32x8xbf16, #tpu.memory_space<vmem>>, vector<1x32x8xbf16>
    %157 = vector.shape_cast %156 : vector<1x32x8xbf16> to vector<32x8xbf16>
    %cst_109 = arith.constant dense<0.000000e+00> : vector<8x8xf32>
    %158 = tpu.matmul %5, %157, %cst_109 {dimension_numbers = #tpu.dot_dimension_numbers<[1], [0], [0], [1], [0, 0, 1, 1], [], []>} : vector<8x32xbf16>, vector<32x8xbf16>, vector<8x8xf32> -> vector<8x8xf32>
    %c3_110 = arith.constant 3 : index
    %c0_111 = arith.constant 0 : index
    %c0_112 = arith.constant 0 : index
    %159 = vector.load %arg10[%c3_110, %c0_111, %c0_112] : memref<4x1x8xf32, #tpu.memory_space<vmem>>, vector<1x1x8xf32>
    %160 = vector.shape_cast %159 : vector<1x1x8xf32> to vector<1x8xf32>
    %161 = vector.broadcast %160 : vector<1x8xf32> to vector<8x8xf32>
    %162 = arith.addf %158, %161 : vector<8x8xf32>
    %c3_113 = arith.constant 3 : index
    %c0_114 = arith.constant 0 : index
    %c0_115 = arith.constant 0 : index
    %163 = vector.load %arg11[%c3_113, %c0_114, %c0_115] : memref<4x32x8xbf16, #tpu.memory_space<vmem>>, vector<1x32x8xbf16>
    %164 = vector.shape_cast %163 : vector<1x32x8xbf16> to vector<32x8xbf16>
    %cst_116 = arith.constant dense<0.000000e+00> : vector<8x8xf32>
    %165 = tpu.matmul %8, %164, %cst_116 {dimension_numbers = #tpu.dot_dimension_numbers<[1], [0], [0], [1], [0, 0, 1, 1], [], []>} : vector<8x32xbf16>, vector<32x8xbf16>, vector<8x8xf32> -> vector<8x8xf32>
    %c3_117 = arith.constant 3 : index
    %c0_118 = arith.constant 0 : index
    %c0_119 = arith.constant 0 : index
    %166 = vector.load %arg12[%c3_117, %c0_118, %c0_119] : memref<4x1x8xf32, #tpu.memory_space<vmem>>, vector<1x1x8xf32>
    %167 = vector.shape_cast %166 : vector<1x1x8xf32> to vector<1x8xf32>
    %168 = vector.broadcast %167 : vector<1x8xf32> to vector<8x8xf32>
    %169 = arith.addf %165, %168 : vector<8x8xf32>
    %170 = arith.truncf %155 : vector<8x8xf32> to vector<8x8xbf16>
    %171 = arith.truncf %162 : vector<8x8xf32> to vector<8x8xbf16>
    %cst_120 = arith.constant dense<0.000000e+00> : vector<8x8xf32>
    %172 = tpu.matmul %170, %171, %cst_120 {dimension_numbers = #tpu.dot_dimension_numbers<[1], [1], [0], [0], [0, 0, 1, 0], [], []>} : vector<8x8xbf16>, vector<8x8xbf16>, vector<8x8xf32> -> vector<8x8xf32>
    %173 = arith.addf %172, %20 : vector<8x8xf32>
    %cst_121 = arith.constant dense<0xFF800000> : vector<8xf32>
    %174 = vector.multi_reduction <maximumf>, %173, %cst_121 [1] : vector<8x8xf32> to vector<8xf32>
    %175 = vector.shape_cast %174 : vector<8xf32> to vector<8x1xf32>
    %176 = vector.broadcast %175 : vector<8x1xf32> to vector<8x8xf32>
    %177 = arith.subf %173, %176 : vector<8x8xf32>
    %178 = math.exp %177 : vector<8x8xf32>
    %cst_122 = arith.constant dense<0.000000e+00> : vector<8xf32>
    %179 = vector.multi_reduction <add>, %178, %cst_122 [1] : vector<8x8xf32> to vector<8xf32>
    %180 = vector.shape_cast %179 : vector<8xf32> to vector<8x1xf32>
    %181 = tpu.reciprocal %180 {approx = true} : vector<8x1xf32> -> vector<8x1xf32>
    %182 = vector.broadcast %181 : vector<8x1xf32> to vector<8x8xf32>
    %183 = arith.mulf %178, %182 : vector<8x8xf32>
    %184 = arith.truncf %183 : vector<8x8xf32> to vector<8x8xbf16>
    %185 = arith.truncf %169 : vector<8x8xf32> to vector<8x8xbf16>
    %cst_123 = arith.constant dense<0.000000e+00> : vector<8x8xf32>
    %186 = tpu.matmul %184, %185, %cst_123 {dimension_numbers = #tpu.dot_dimension_numbers<[1], [0], [0], [1], [0, 0, 1, 1], [], []>} : vector<8x8xbf16>, vector<8x8xbf16>, vector<8x8xf32> -> vector<8x8xf32>
    %187 = arith.truncf %186 : vector<8x8xf32> to vector<8x8xbf16>
    %c3_124 = arith.constant 3 : index
    %c0_125 = arith.constant 0 : index
    %c0_126 = arith.constant 0 : index
    %188 = vector.load %arg13[%c3_124, %c0_125, %c0_126] : memref<4x8x32xbf16, #tpu.memory_space<vmem>>, vector<1x8x32xbf16>
    %189 = vector.shape_cast %188 : vector<1x8x32xbf16> to vector<8x32xbf16>
    %cst_127 = arith.constant dense<0.000000e+00> : vector<8x32xf32>
    %190 = tpu.matmul %187, %189, %cst_127 {dimension_numbers = #tpu.dot_dimension_numbers<[1], [0], [0], [1], [0, 0, 1, 1], [], []>} : vector<8x8xbf16>, vector<8x32xbf16>, vector<8x32xf32> -> vector<8x32xf32>
    %191 = arith.addf %148, %190 : vector<8x32xf32>
    %c0_128 = arith.constant 0 : index
    %c0_129 = arith.constant 0 : index
    %192 = vector.load %arg14[%c0_128, %c0_129] : memref<1x32xf32, #tpu.memory_space<vmem>>, vector<1x32xf32>
    %193 = vector.broadcast %192 : vector<1x32xf32> to vector<8x32xf32>
    %194 = arith.addf %191, %193 : vector<8x32xf32>
    %c0_130 = arith.constant 0 : index
    %c0_131 = arith.constant 0 : index
    %c0_132 = arith.constant 0 : index
    %195 = vector.load %arg15[%c0_130, %c0_131, %c0_132] : memref<1x8x32xf32, #tpu.memory_space<vmem>>, vector<1x8x32xf32>
    %196 = vector.shape_cast %195 : vector<1x8x32xf32> to vector<8x32xf32>
    %197 = vector.shape_cast %194 : vector<8x32xf32> to vector<1x8x32xf32>
    tpu.vector_store %arg15[%c0_130, %c0_131, %c0_132], %197 {strides = array<i32>} : memref<1x8x32xf32, #tpu.memory_space<vmem>>, vector<1x8x32xf32>,
    return
  }
  func.func @transform_0(%arg0: i32, %arg1: i32) -> (i32, i32, i32) {
    %c0_i32 = arith.constant 0 : i32
    %c0_i32_0 = arith.constant 0 : i32
    return %arg0, %arg1, %c0_i32 : i32, i32, i32
  }
  func.func @transform_1(%arg0: i32, %arg1: i32) -> (i32, i32, i32) {
    %c0_i32 = arith.constant 0 : i32
    %c0_i32_0 = arith.constant 0 : i32
    %c0_i32_1 = arith.constant 0 : i32
    return %arg0, %c0_i32, %c0_i32_0 : i32, i32, i32
  }
  func.func @transform_2(%arg0: i32, %arg1: i32) -> (i32, i32, i32) {
    %c0_i32 = arith.constant 0 : i32
    %c0_i32_0 = arith.constant 0 : i32
    %c0_i32_1 = arith.constant 0 : i32
    return %arg0, %c0_i32, %c0_i32_0 : i32, i32, i32
  }
  func.func @transform_3(%arg0: i32, %arg1: i32) -> (i32, i32, i32) {
    %c0_i32 = arith.constant 0 : i32
    %c0_i32_0 = arith.constant 0 : i32
    %c0_i32_1 = arith.constant 0 : i32
    return %arg0, %c0_i32, %c0_i32_0 : i32, i32, i32
  }
  func.func @transform_4(%arg0: i32, %arg1: i32) -> (i32, i32) {
    %c0_i32 = arith.constant 0 : i32
    %c0_i32_0 = arith.constant 0 : i32
    return %arg1, %c0_i32 : i32, i32
  }
  func.func @transform_5(%arg0: i32, %arg1: i32) -> (i32, i32, i32) {
    %c0_i32 = arith.constant 0 : i32
    %c0_i32_0 = arith.constant 0 : i32
    %c0_i32_1 = arith.constant 0 : i32
    %c0_i32_2 = arith.constant 0 : i32
    return %c0_i32, %c0_i32_0, %c0_i32_1 : i32, i32, i32
  }
  func.func @transform_6(%arg0: i32, %arg1: i32) -> (i32, i32, i32) {
    %c0_i32 = arith.constant 0 : i32
    %c0_i32_0 = arith.constant 0 : i32
    %c0_i32_1 = arith.constant 0 : i32
    %c0_i32_2 = arith.constant 0 : i32
    return %c0_i32, %c0_i32_0, %c0_i32_1 : i32, i32, i32
  }
  func.func @transform_7(%arg0: i32, %arg1: i32) -> (i32, i32, i32) {
    %c0_i32 = arith.constant 0 : i32
    %c0_i32_0 = arith.constant 0 : i32
    %c0_i32_1 = arith.constant 0 : i32
    %c0_i32_2 = arith.constant 0 : i32
    return %c0_i32, %c0_i32_0, %c0_i32_1 : i32, i32, i32
  }
  func.func @transform_8(%arg0: i32, %arg1: i32) -> (i32, i32, i32) {
    %c0_i32 = arith.constant 0 : i32
    %c0_i32_0 = arith.constant 0 : i32
    %c0_i32_1 = arith.constant 0 : i32
    %c0_i32_2 = arith.constant 0 : i32
    return %c0_i32, %c0_i32_0, %c0_i32_1 : i32, i32, i32
  }
  func.func @transform_9(%arg0: i32, %arg1: i32) -> (i32, i32, i32) {
    %c0_i32 = arith.constant 0 : i32
    %c0_i32_0 = arith.constant 0 : i32
    %c0_i32_1 = arith.constant 0 : i32
    %c0_i32_2 = arith.constant 0 : i32
    return %c0_i32, %c0_i32_0, %c0_i32_1 : i32, i32, i32
  }
  func.func @transform_10(%arg0: i32, %arg1: i32) -> (i32, i32, i32) {
    %c0_i32 = arith.constant 0 : i32
    %c0_i32_0 = arith.constant 0 : i32
    %c0_i32_1 = arith.constant 0 : i32
    %c0_i32_2 = arith.constant 0 : i32
    return %c0_i32, %c0_i32_0, %c0_i32_1 : i32, i32, i32
  }
  func.func @transform_11(%arg0: i32, %arg1: i32) -> (i32, i32, i32) {
    %c0_i32 = arith.constant 0 : i32
    %c0_i32_0 = arith.constant 0 : i32
    %c0_i32_1 = arith.constant 0 : i32
    %c0_i32_2 = arith.constant 0 : i32
    return %c0_i32, %c0_i32_0, %c0_i32_1 : i32, i32, i32
  }
  func.func @transform_12(%arg0: i32, %arg1: i32) -> (i32, i32) {
    %c0_i32 = arith.constant 0 : i32
    %c0_i32_0 = arith.constant 0 : i32
    %c0_i32_1 = arith.constant 0 : i32
    return %c0_i32, %c0_i32_0 : i32, i32
  }
  func.func @transform_13(%arg0: i32, %arg1: i32) -> (i32, i32, i32) {
    %c0_i32 = arith.constant 0 : i32
    %c0_i32_0 = arith.constant 0 : i32
    return %arg0, %arg1, %c0_i32 : i32, i32, i32
  }
}

</mosaic_0001>

<llo_original>
// kernel: tpu_custom_call.1
$region0: #{tpu_custom_call.1}
  #allocation0 [shape = 'u32[]', space=smem, size = 0x4, offset = 0x4, fixed_abs, tag = 'smem constant byte address 0x4 - core index']
  #allocation1 [shape = 'u32[144,128]{1,0:T(1,128)}', space=vmem, size = 0x12000, scoped, tag = 'internal scratch']
  %s0 = inlined_call_operand.vmem [shape: f32[2,8,32], index: 0, kind: input, shape index: {}]
  %s1 = inlined_call_operand.vmem [shape: f32[2,8,32], index: 1, kind: input, shape index: {}]
  %s2 = inlined_call_operand.vmem [shape: f32[2,8,32], index: 2, kind: input, shape index: {}]
  %s3 = inlined_call_operand.vmem [shape: s8[2,1,8], index: 3, kind: input, shape index: {}]
  %s4 = inlined_call_operand.vmem [shape: s8[8,8], index: 4, kind: input, shape index: {}]
  %s5 = inlined_call_operand.vmem [shape: bf16[4,32,8], index: 5, kind: input, shape index: {}]
  %s6 = inlined_call_operand.vmem [shape: f32[4,1,8], index: 6, kind: input, shape index: {}]
  %s7 = inlined_call_operand.vmem [shape: bf16[4,32,8], index: 7, kind: input, shape index: {}]
  %s8 = inlined_call_operand.vmem [shape: f32[4,1,8], index: 8, kind: input, shape index: {}]
  %s9 = inlined_call_operand.vmem [shape: bf16[4,32,8], index: 9, kind: input, shape index: {}]
  %s10 = inlined_call_operand.vmem [shape: f32[4,1,8], index: 10, kind: input, shape index: {}]
  %s11 = inlined_call_operand.vmem [shape: bf16[4,8,32], index: 11, kind: input, shape index: {}]
  %s12 = inlined_call_operand.vmem [shape: f32[1,32], index: 12, kind: input, shape index: {}]
  %s13 = inlined_call_operand.hbm [shape: f32[2,8,32], index: 13, kind: output, shape index: {}]
  %s14 = sld [smem:[#allocation0]]
  $region85: #{tpu_custom_call.1} parent=0
    _
  %s16 = ssub.s32 1, %s14
  %s17 = scalar_select 0, %s16, %s14
  $region1: #{tpu_custom_call.1} parent=0
    #allocation2 [shape = 'u8[8192]{0}', space=vmem, size = 0x2000, scoped, tag = 'output window, operand 0']
    #allocation3 [shape = 's32[2]{0}', space=sflag, size = 0x8, scoped, tag = 'scoped memory for tpu_custom_call.1']
    %18 = vsyncpa [#allocation3], 0
    %s19 = scalar_lea.sflag [#allocation3], 1
    %20 = vsyncpa %s19, 0
    loop: start=0, step=1, limit=4
    $region2: #{tpu_custom_call.1} parent=1 // loop_pre_header
      _
    $region3: #{tpu_custom_call.1} parent=1 // loop_header
      %s22 = sphi 0, %s26
      %p23 = scmp.ge.s32.totalorder %s22, 4
      %s29 = sphi 0, %s41
      %s30 = sphi 0, %s37
      %s31 = sphi 0, %s29
      %s32 = sphi 0, %s30
      %s33 = sphi 0, %s31
      %s34 = sphi 0, %s32
      %s46 = sphi 0, %s48
      %s49 = sphi 0, %s46
      %s50 = sphi 0, %s49
      %s66 = sphi 0, %s50
      %s72 = sphi 0, %s74
      %s75 = sphi 0, %s72
      %s76 = sphi 0, %s75
      %s92 = sphi 0, %s76
      %s98 = sphi 0, %s100
      %s101 = sphi 0, %s98
      %s102 = sphi 0, %s101
      %s118 = sphi 0, %s102
      %s124 = sphi 0, %s126
      %s127 = sphi 0, %s124
      %s128 = sphi 0, %s127
      %s144 = sphi 0, %s128
      %s150 = sphi 0, %s152
      %s153 = sphi 0, %s150
      %s154 = sphi 0, %s153
      %s170 = sphi 0, %s154
      %s174 = sphi 0, %s174
      %s176 = sphi 0, %s174
      %s177 = sphi 0, %s176
      %s191 = sphi 0, %s177
      %s195 = sphi 0, %s195
      %s197 = sphi 0, %s195
      %s198 = sphi 0, %s197
      %s212 = sphi 0, %s198
      %s216 = sphi 0, %s216
      %s218 = sphi 0, %s216
      %s219 = sphi 0, %s218
      %s233 = sphi 0, %s219
      %s237 = sphi 0, %s237
      %s239 = sphi 0, %s237
      %s240 = sphi 0, %s239
      %s254 = sphi 0, %s240
      %s258 = sphi 0, %s258
      %s260 = sphi 0, %s258
      %s261 = sphi 0, %s260
      %s275 = sphi 0, %s261
      %s279 = sphi 0, %s279
      %s281 = sphi 0, %s279
      %s282 = sphi 0, %s281
      %s296 = sphi 0, %s282
      %s300 = sphi 0, %s300
      %s302 = sphi 0, %s300
      %s303 = sphi 0, %s302
      %s317 = sphi 0, %s303
      %s321 = sphi 0, %s321
      %s323 = sphi 0, %s321
      %s324 = sphi 0, %s323
      %s338 = sphi 0, %s324
      %s346 = sphi 0, %s348
      %s349 = sphi 0, %s346
      %s350 = sphi 0, %s349
      %s366 = sphi 0, %s350
    $region4: #{tpu_custom_call.1} parent=1 // loop_header_branch
      %25 = sbr.rel (%p23) target = $region8
    $region5: #{tpu_custom_call.1} parent=1 // loop_body
      %s27 = ssub.s32 %s22, 1
      %s28 = ssub.s32 %s22, 2
      %s35 = sadd.s32 1, %s30
      %p36 = scmp.ge.s32.totalorder %s35, 1
      %s37 = scalar_select %p36, 0, %s35
      %s38 = sadd.s32 1, %s29
      %s39 = scalar_select %p36, %s38, %s29
      %p40 = scmp.ge.s32.totalorder %s39, 2
      %s41 = scalar_select %p40, 0, %s39
      %s42 = ssub.s32 %s29, %s41
      %s43 = ssub.s32 %s30, %s37
      %s44 = sor.u32 %s42, %s43
      %p45 = scmp.eq.s32.totalorder %s44, 0
      %s47 = sadd.s32 %s46, 1
      %s48 = scalar_select %p45, %s46, %s47
      %p51 = pneg %p45
      %p52 = scmp.eq.s32.totalorder %s22, 1
      %p53 = por %p51, %p52
      %p54 = scmp.ne.s32.totalorder %s46, %s49
      %p55 = scmp.eq.s32.totalorder %s22, 0
      %p56 = por %p54, %p55
      %p57 = scmp.ne.s32.totalorder %s46, %s49
      %p58 = scmp.eq.s32.totalorder %s27, 1
      %p59 = por %p57, %p58
      %p60 = scmp.ne.s32.totalorder %s49, %s50
      %p61 = scmp.eq.s32.totalorder %s27, 0
      %p62 = por %p60, %p61
      %p63 = scmp.ne.s32.totalorder %s49, %s50
      %p64 = scmp.eq.s32.totalorder %s28, 1
      %p65 = por %p63, %p64
      %p67 = scmp.ne.s32.totalorder %s50, %s66
      %p68 = scmp.eq.s32.totalorder %s28, 0
      %p69 = por %p67, %p68
      %s70 = ssub.s32 %s29, %s41
      %p71 = scmp.eq.s32.totalorder %s70, 0
      %s73 = sadd.s32 %s72, 1
      %s74 = scalar_select %p71, %s72, %s73
      %p77 = pneg %p71
      %p78 = scmp.eq.s32.totalorder %s22, 1
      %p79 = por %p77, %p78
      %p80 = scmp.ne.s32.totalorder %s72, %s75
      %p81 = scmp.eq.s32.totalorder %s22, 0
      %p82 = por %p80, %p81
      %p83 = scmp.ne.s32.totalorder %s72, %s75
      %p84 = scmp.eq.s32.totalorder %s27, 1
      %p85 = por %p83, %p84
      %p86 = scmp.ne.s32.totalorder %s75, %s76
      %p87 = scmp.eq.s32.totalorder %s27, 0
      %p88 = por %p86, %p87
      %p89 = scmp.ne.s32.totalorder %s75, %s76
      %p90 = scmp.eq.s32.totalorder %s28, 1
      %p91 = por %p89, %p90
      %p93 = scmp.ne.s32.totalorder %s76, %s92
      %p94 = scmp.eq.s32.totalorder %s28, 0
      %p95 = por %p93, %p94
      %s96 = ssub.s32 %s29, %s41
      %p97 = scmp.eq.s32.totalorder %s96, 0
      %s99 = sadd.s32 %s98, 1
      %s100 = scalar_select %p97, %s98, %s99
      %p103 = pneg %p97
      %p104 = scmp.eq.s32.totalorder %s22, 1
      %p105 = por %p103, %p104
      %p106 = scmp.ne.s32.totalorder %s98, %s101
      %p107 = scmp.eq.s32.totalorder %s22, 0
      %p108 = por %p106, %p107
      %p109 = scmp.ne.s32.totalorder %s98, %s101
      %p110 = scmp.eq.s32.totalorder %s27, 1
      %p111 = por %p109, %p110
      %p112 = scmp.ne.s32.totalorder %s101, %s102
      %p113 = scmp.eq.s32.totalorder %s27, 0
      %p114 = por %p112, %p113
      %p115 = scmp.ne.s32.totalorder %s101, %s102
      %p116 = scmp.eq.s32.totalorder %s28, 1
      %p117 = por %p115, %p116
      %p119 = scmp.ne.s32.totalorder %s102, %s118
      %p120 = scmp.eq.s32.totalorder %s28, 0
      %p121 = por %p119, %p120
      %s122 = ssub.s32 %s29, %s41
      %p123 = scmp.eq.s32.totalorder %s122, 0
      %s125 = sadd.s32 %s124, 1
      %s126 = scalar_select %p123, %s124, %s125
      %p129 = pneg %p123
      %p130 = scmp.eq.s32.totalorder %s22, 1
      %p131 = por %p129, %p130
      %p132 = scmp.ne.s32.totalorder %s124, %s127
      %p133 = scmp.eq.s32.totalorder %s22, 0
      %p134 = por %p132, %p133
      %p135 = scmp.ne.s32.totalorder %s124, %s127
      %p136 = scmp.eq.s32.totalorder %s27, 1
      %p137 = por %p135, %p136
      %p138 = scmp.ne.s32.totalorder %s127, %s128
      %p139 = scmp.eq.s32.totalorder %s27, 0
      %p140 = por %p138, %p139
      %p141 = scmp.ne.s32.totalorder %s127, %s128
      %p142 = scmp.eq.s32.totalorder %s28, 1
      %p143 = por %p141, %p142
      %p145 = scmp.ne.s32.totalorder %s128, %s144
      %p146 = scmp.eq.s32.totalorder %s28, 0
      %p147 = por %p145, %p146
      %s148 = ssub.s32 %s30, %s37
      %p149 = scmp.eq.s32.totalorder %s148, 0
      %s151 = sadd.s32 %s150, 1
      %s152 = scalar_select %p149, %s150, %s151
      %p155 = pneg %p149
      %p156 = scmp.eq.s32.totalorder %s22, 1
      %p157 = por %p155, %p156
      %p158 = scmp.ne.s32.totalorder %s150, %s153
      %p159 = scmp.eq.s32.totalorder %s22, 0
      %p160 = por %p158, %p159
      %p161 = scmp.ne.s32.totalorder %s150, %s153
      %p162 = scmp.eq.s32.totalorder %s27, 1
      %p163 = por %p161, %p162
      %p164 = scmp.ne.s32.totalorder %s153, %s154
      %p165 = scmp.eq.s32.totalorder %s27, 0
      %p166 = por %p164, %p165
      %p167 = scmp.ne.s32.totalorder %s153, %s154
      %p168 = scmp.eq.s32.totalorder %s28, 1
      %p169 = por %p167, %p168
      %p171 = scmp.ne.s32.totalorder %s154, %s170
      %p172 = scmp.eq.s32.totalorder %s28, 0
      %p173 = por %p171, %p172
      %s175 = sadd.s32 %s174, 1
      %p178 = scmp.eq.s32.totalorder %s22, 1
      %p179 = scmp.ne.s32.totalorder %s174, %s176
      %p180 = scmp.eq.s32.totalorder %s22, 0
      %p181 = por %p179, %p180
      %p182 = scmp.ne.s32.totalorder %s174, %s176
      %p183 = scmp.eq.s32.totalorder %s27, 1
      %p184 = por %p182, %p183
      %p185 = scmp.ne.s32.totalorder %s176, %s177
      %p186 = scmp.eq.s32.totalorder %s27, 0
      %p187 = por %p185, %p186
      %p188 = scmp.ne.s32.totalorder %s176, %s177
      %p189 = scmp.eq.s32.totalorder %s28, 1
      %p190 = por %p188, %p189
      %p192 = scmp.ne.s32.totalorder %s177, %s191
      %p193 = scmp.eq.s32.totalorder %s28, 0
      %p194 = por %p192, %p193
      %s196 = sadd.s32 %s195, 1
      %p199 = scmp.eq.s32.totalorder %s22, 1
      %p200 = scmp.ne.s32.totalorder %s195, %s197
      %p201 = scmp.eq.s32.totalorder %s22, 0
      %p202 = por %p200, %p201
      %p203 = scmp.ne.s32.totalorder %s195, %s197
      %p204 = scmp.eq.s32.totalorder %s27, 1
      %p205 = por %p203, %p204
      %p206 = scmp.ne.s32.totalorder %s197, %s198
      %p207 = scmp.eq.s32.totalorder %s27, 0
      %p208 = por %p206, %p207
      %p209 = scmp.ne.s32.totalorder %s197, %s198
      %p210 = scmp.eq.s32.totalorder %s28, 1
      %p211 = por %p209, %p210
      %p213 = scmp.ne.s32.totalorder %s198, %s212
      %p214 = scmp.eq.s32.totalorder %s28, 0
      %p215 = por %p213, %p214
      %s217 = sadd.s32 %s216, 1
      %p220 = scmp.eq.s32.totalorder %s22, 1
      %p221 = scmp.ne.s32.totalorder %s216, %s218
      %p222 = scmp.eq.s32.totalorder %s22, 0
      %p223 = por %p221, %p222
      %p224 = scmp.ne.s32.totalorder %s216, %s218
      %p225 = scmp.eq.s32.totalorder %s27, 1
      %p226 = por %p224, %p225
      %p227 = scmp.ne.s32.totalorder %s218, %s219
      %p228 = scmp.eq.s32.totalorder %s27, 0
      %p229 = por %p227, %p228
      %p230 = scmp.ne.s32.totalorder %s218, %s219
      %p231 = scmp.eq.s32.totalorder %s28, 1
      %p232 = por %p230, %p231
      %p234 = scmp.ne.s32.totalorder %s219, %s233
      %p235 = scmp.eq.s32.totalorder %s28, 0
      %p236 = por %p234, %p235
      %s238 = sadd.s32 %s237, 1
      %p241 = scmp.eq.s32.totalorder %s22, 1
      %p242 = scmp.ne.s32.totalorder %s237, %s239
      %p243 = scmp.eq.s32.totalorder %s22, 0
      %p244 = por %p242, %p243
      %p245 = scmp.ne.s32.totalorder %s237, %s239
      %p246 = scmp.eq.s32.totalorder %s27, 1
      %p247 = por %p245, %p246
      %p248 = scmp.ne.s32.totalorder %s239, %s240
      %p249 = scmp.eq.s32.totalorder %s27, 0
      %p250 = por %p248, %p249
      %p251 = scmp.ne.s32.totalorder %s239, %s240
      %p252 = scmp.eq.s32.totalorder %s28, 1
      %p253 = por %p251, %p252
      %p255 = scmp.ne.s32.totalorder %s240, %s254
      %p256 = scmp.eq.s32.totalorder %s28, 0
      %p257 = por %p255, %p256
      %s259 = sadd.s32 %s258, 1
      %p262 = scmp.eq.s32.totalorder %s22, 1
      %p263 = scmp.ne.s32.totalorder %s258, %s260
      %p264 = scmp.eq.s32.totalorder %s22, 0
      %p265 = por %p263, %p264
      %p266 = scmp.ne.s32.totalorder %s258, %s260
      %p267 = scmp.eq.s32.totalorder %s27, 1
      %p268 = por %p266, %p267
      %p269 = scmp.ne.s32.totalorder %s260, %s261
      %p270 = scmp.eq.s32.totalorder %s27, 0
      %p271 = por %p269, %p270
      %p272 = scmp.ne.s32.totalorder %s260, %s261
      %p273 = scmp.eq.s32.totalorder %s28, 1
      %p274 = por %p272, %p273
      %p276 = scmp.ne.s32.totalorder %s261, %s275
      %p277 = scmp.eq.s32.totalorder %s28, 0
      %p278 = por %p276, %p277
      %s280 = sadd.s32 %s279, 1
      %p283 = scmp.eq.s32.totalorder %s22, 1
      %p284 = scmp.ne.s32.totalorder %s279, %s281
      %p285 = scmp.eq.s32.totalorder %s22, 0
      %p286 = por %p284, %p285
      %p287 = scmp.ne.s32.totalorder %s279, %s281
      %p288 = scmp.eq.s32.totalorder %s27, 1
      %p289 = por %p287, %p288
      %p290 = scmp.ne.s32.totalorder %s281, %s282
      %p291 = scmp.eq.s32.totalorder %s27, 0
      %p292 = por %p290, %p291
      %p293 = scmp.ne.s32.totalorder %s281, %s282
      %p294 = scmp.eq.s32.totalorder %s28, 1
      %p295 = por %p293, %p294
      %p297 = scmp.ne.s32.totalorder %s282, %s296
      %p298 = scmp.eq.s32.totalorder %s28, 0
      %p299 = por %p297, %p298
      %s301 = sadd.s32 %s300, 1
      %p304 = scmp.eq.s32.totalorder %s22, 1
      %p305 = scmp.ne.s32.totalorder %s300, %s302
      %p306 = scmp.eq.s32.totalorder %s22, 0
      %p307 = por %p305, %p306
      %p308 = scmp.ne.s32.totalorder %s300, %s302
      %p309 = scmp.eq.s32.totalorder %s27, 1
      %p310 = por %p308, %p309
      %p311 = scmp.ne.s32.totalorder %s302, %s303
      %p312 = scmp.eq.s32.totalorder %s27, 0
      %p313 = por %p311, %p312
      %p314 = scmp.ne.s32.totalorder %s302, %s303
      %p315 = scmp.eq.s32.totalorder %s28, 1
      %p316 = por %p314, %p315
      %p318 = scmp.ne.s32.totalorder %s303, %s317
      %p319 = scmp.eq.s32.totalorder %s28, 0
      %p320 = por %p318, %p319
      %s322 = sadd.s32 %s321, 1
      %p325 = scmp.eq.s32.totalorder %s22, 1
      %p326 = scmp.ne.s32.totalorder %s321, %s323
      %p327 = scmp.eq.s32.totalorder %s22, 0
      %p328 = por %p326, %p327
      %p329 = scmp.ne.s32.totalorder %s321, %s323
      %p330 = scmp.eq.s32.totalorder %s27, 1
      %p331 = por %p329, %p330
      %p332 = scmp.ne.s32.totalorder %s323, %s324
      %p333 = scmp.eq.s32.totalorder %s27, 0
      %p334 = por %p332, %p333
      %p335 = scmp.ne.s32.totalorder %s323, %s324
      %p336 = scmp.eq.s32.totalorder %s28, 1
      %p337 = por %p335, %p336
      %p339 = scmp.ne.s32.totalorder %s324, %s338
      %p340 = scmp.eq.s32.totalorder %s28, 0
      %p341 = por %p339, %p340
      %s342 = ssub.s32 %s29, %s41
      %s343 = ssub.s32 %s30, %s37
      %s344 = sor.u32 %s342, %s343
      %p345 = scmp.eq.s32.totalorder %s344, 0
      %s347 = sadd.s32 %s346, 1
      %s348 = scalar_select %p345, %s346, %s347
      %p351 = pneg %p345
      %p352 = scmp.eq.s32.totalorder %s22, 1
      %p353 = por %p351, %p352
      %p354 = scmp.ne.s32.totalorder %s346, %s349
      %p355 = scmp.eq.s32.totalorder %s22, 0
      %p356 = por %p354, %p355
      %p357 = scmp.ne.s32.totalorder %s346, %s349
      %p358 = scmp.eq.s32.totalorder %s27, 1
      %p359 = por %p357, %p358
      %p360 = scmp.ne.s32.totalorder %s349, %s350
      %p361 = scmp.eq.s32.totalorder %s27, 0
      %p362 = por %p360, %p361
      %p363 = scmp.ne.s32.totalorder %s349, %s350
      %p364 = scmp.eq.s32.totalorder %s28, 1
      %p365 = por %p363, %p364
      %p367 = scmp.ne.s32.totalorder %s350, %s366
      %p368 = scmp.eq.s32.totalorder %s28, 0
      %p369 = por %p367, %p368
      %p370 = scmp.le.s32.totalorder 1, %s22
      %p371 = scmp.lt.s32.totalorder %s22, 3
      %p372 = pnand %p370, %p371
      %p373 = pneg %p372
      // Predicated region
      $region9: #{tpu_custom_call.1} parent=5 // pred_check
        _
      $region10: #{tpu_custom_call.1} parent=5 // pred_check_branch
        %375 = sbr.rel (%p372) target = $region12
      $region11: #{tpu_custom_call.1} parent=5 // pred_region
        %s376 = ssub.s32 %s22, 1
        // Predicated region
        $region13: #{tpu_custom_call.1} parent=11 // pred_check
          %p377 = pneg %p166
        $region14: #{tpu_custom_call.1} parent=11 // pred_check_branch
          %379 = sbr.rel (%p377) target = $region16
        $region15: #{tpu_custom_call.1} parent=11 // pred_region
          %p380 = scmp.lt.s32.totalorder %s32, 0
          %s381 = scalar_select %p380, %s32, 0
          %s382 = smul.addr %s381, 2
          %s383 = scalar_lea.vmem %s4, %s382
        $region16: #{tpu_custom_call.1} parent=11 // pred_fallthru
          _
        // Predicated region
        $region17: #{tpu_custom_call.1} parent=11 // pred_check
          %p384 = pneg %p187
        $region18: #{tpu_custom_call.1} parent=11 // pred_check_branch
          %386 = sbr.rel (%p384) target = $region20
        $region19: #{tpu_custom_call.1} parent=11 // pred_region
          _
        $region20: #{tpu_custom_call.1} parent=11 // pred_fallthru
          _
        // Predicated region
        $region21: #{tpu_custom_call.1} parent=11 // pred_check
          %p387 = pneg %p208
        $region22: #{tpu_custom_call.1} parent=11 // pred_check_branch
          %389 = sbr.rel (%p387) target = $region24
        $region23: #{tpu_custom_call.1} parent=11 // pred_region
          _
        $region24: #{tpu_custom_call.1} parent=11 // pred_fallthru
          _
        // Predicated region
        $region25: #{tpu_custom_call.1} parent=11 // pred_check
          %p390 = pneg %p229
        $region26: #{tpu_custom_call.1} parent=11 // pred_check_branch
          %392 = sbr.rel (%p390) target = $region28
        $region27: #{tpu_custom_call.1} parent=11 // pred_region
          _
        $region28: #{tpu_custom_call.1} parent=11 // pred_fallthru
          _
        // Predicated region
        $region29: #{tpu_custom_call.1} parent=11 // pred_check
          %p393 = pneg %p250
        $region30: #{tpu_custom_call.1} parent=11 // pred_check_branch
          %395 = sbr.rel (%p393) target = $region32
        $region31: #{tpu_custom_call.1} parent=11 // pred_region
          _
        $region32: #{tpu_custom_call.1} parent=11 // pred_fallthru
          _
        // Predicated region
        $region33: #{tpu_custom_call.1} parent=11 // pred_check
          %p396 = pneg %p271
        $region34: #{tpu_custom_call.1} parent=11 // pred_check_branch
          %398 = sbr.rel (%p396) target = $region36
        $region35: #{tpu_custom_call.1} parent=11 // pred_region
          _
        $region36: #{tpu_custom_call.1} parent=11 // pred_fallthru
          _
        // Predicated region
        $region37: #{tpu_custom_call.1} parent=11 // pred_check
          %p399 = pneg %p292
        $region38: #{tpu_custom_call.1} parent=11 // pred_check_branch
          %401 = sbr.rel (%p399) target = $region40
        $region39: #{tpu_custom_call.1} parent=11 // pred_region
          _
        $region40: #{tpu_custom_call.1} parent=11 // pred_fallthru
          _
        // Predicated region
        $region41: #{tpu_custom_call.1} parent=11 // pred_check
          %p402 = pneg %p313
        $region42: #{tpu_custom_call.1} parent=11 // pred_check_branch
          %404 = sbr.rel (%p402) target = $region44
        $region43: #{tpu_custom_call.1} parent=11 // pred_region
          _
        $region44: #{tpu_custom_call.1} parent=11 // pred_fallthru
          _
        // Predicated region
        $region45: #{tpu_custom_call.1} parent=11 // pred_check
          %p405 = pneg %p334
        $region46: #{tpu_custom_call.1} parent=11 // pred_check_branch
          %407 = sbr.rel (%p405) target = $region48
        $region47: #{tpu_custom_call.1} parent=11 // pred_region
          _
        $region48: #{tpu_custom_call.1} parent=11 // pred_fallthru
          _
      $region12: #{tpu_custom_call.1} parent=5 // pred_fallthru
        _
      %p408 = scmp.lt.s32.totalorder %s22, 2
      // Predicated region
      $region49: #{tpu_custom_call.1} parent=5 // pred_check
        %p409 = pneg %p408
      $region50: #{tpu_custom_call.1} parent=5 // pred_check_branch
        %411 = sbr.rel (%p409) target = $region52
      $region51: #{tpu_custom_call.1} parent=5 // pred_region
        // Predicated region
        $region53: #{tpu_custom_call.1} parent=51 // pred_check
          %p412 = pneg %p56
        $region54: #{tpu_custom_call.1} parent=51 // pred_check_branch
          %414 = sbr.rel (%p412) target = $region56
        $region55: #{tpu_custom_call.1} parent=51 // pred_region
          %p415 = scmp.lt.s32.totalorder %s29, 1
          %s416 = scalar_select %p415, %s29, 1
          %p417 = scmp.lt.s32.totalorder %s30, 0
          %s418 = scalar_select %p417, %s30, 0
          %s419 = sadd.s32 %s418, %s416
          %s420 = smul.addr %s419, 8
          %s421 = scalar_lea.vmem %s0, %s420
        $region56: #{tpu_custom_call.1} parent=51 // pred_fallthru
          _
        // Predicated region
        $region57: #{tpu_custom_call.1} parent=51 // pred_check
          %p422 = pneg %p82
        $region58: #{tpu_custom_call.1} parent=51 // pred_check_branch
          %424 = sbr.rel (%p422) target = $region60
        $region59: #{tpu_custom_call.1} parent=51 // pred_region
          %p425 = scmp.lt.s32.totalorder %s29, 1
          %s426 = scalar_select %p425, %s29, 1
          %s427 = smul.addr %s426, 8
          %s428 = scalar_lea.vmem %s1, %s427
        $region60: #{tpu_custom_call.1} parent=51 // pred_fallthru
          _
        // Predicated region
        $region61: #{tpu_custom_call.1} parent=51 // pred_check
          %p429 = pneg %p108
        $region62: #{tpu_custom_call.1} parent=51 // pred_check_branch
          %431 = sbr.rel (%p429) target = $region64
        $region63: #{tpu_custom_call.1} parent=51 // pred_region
          %p432 = scmp.lt.s32.totalorder %s29, 1
          %s433 = scalar_select %p432, %s29, 1
          %s434 = smul.addr %s433, 8
          %s435 = scalar_lea.vmem %s2, %s434
        $region64: #{tpu_custom_call.1} parent=51 // pred_fallthru
          _
        // Predicated region
        $region65: #{tpu_custom_call.1} parent=51 // pred_check
          %p436 = pneg %p134
        $region66: #{tpu_custom_call.1} parent=51 // pred_check_branch
          %438 = sbr.rel (%p436) target = $region68
        $region67: #{tpu_custom_call.1} parent=51 // pred_region
          %p439 = scmp.lt.s32.totalorder %s29, 1
          %s440 = scalar_select %p439, %s29, 1
          %s441 = scalar_lea.vmem %s3, %s440
        $region68: #{tpu_custom_call.1} parent=51 // pred_fallthru
          _
      $region52: #{tpu_custom_call.1} parent=5 // pred_fallthru
        _
      %p442 = scmp.le.s32.totalorder 1, %s22
      %p443 = scmp.lt.s32.totalorder %s22, 3
      %p444 = pnand %p442, %p443
      %p445 = pneg %p444
      // Predicated region
      $region69: #{tpu_custom_call.1} parent=5 // pred_check
        _
      $region70: #{tpu_custom_call.1} parent=5 // pred_check_branch
        %447 = sbr.rel (%p444) target = $region72
      $region71: #{tpu_custom_call.1} parent=5 // pred_region
        %s448 = ssub.s32 %s22, 1
        %p449 = scmp.lt.s32.totalorder %s31, 1
        %s450 = scalar_select %p449, %s31, 1
        %p451 = scmp.lt.s32.totalorder %s32, 0
        %s452 = scalar_select %p451, %s32, 0
        %s453 = sadd.s32 %s452, %s450
        %s454 = smul.addr %s453, 8
        %s455 = scalar_lea.vmem %s0, %s454
        %p456 = pneg %p62
        %p457 = pneg %p59
        %p458 = scmp.lt.s32.totalorder %s31, 1
        %s459 = scalar_select %p458, %s31, 1
        %s460 = smul.addr %s459, 8
        %s461 = scalar_lea.vmem %s1, %s460
        %p462 = pneg %p88
        %p463 = pneg %p85
        %p464 = scmp.lt.s32.totalorder %s31, 1
        %s465 = scalar_select %p464, %s31, 1
        %s466 = smul.addr %s465, 8
        %s467 = scalar_lea.vmem %s2, %s466
        %p468 = pneg %p114
        %p469 = pneg %p111
        %p470 = scmp.lt.s32.totalorder %s31, 1
        %s471 = scalar_select %p470, %s31, 1
        %s472 = scalar_lea.vmem %s3, %s471
        %p473 = pneg %p140
        %p474 = pneg %p137
        %p475 = scmp.lt.s32.totalorder %s32, 0
        %s476 = scalar_select %p475, %s32, 0
        %s477 = smul.addr %s476, 2
        %s478 = scalar_lea.vmem %s4, %s477
        %p479 = pneg %p166
        %p480 = pneg %p163
        %p481 = pneg %p187
        %p482 = pneg %p184
        %p483 = pneg %p208
        %p484 = pneg %p205
        %p485 = pneg %p229
        %p486 = pneg %p226
        %p487 = pneg %p250
        %p488 = pneg %p247
        %p489 = pneg %p271
        %p490 = pneg %p268
        %p491 = pneg %p292
        %p492 = pneg %p289
        %p493 = pneg %p313
        %p494 = pneg %p310
        %p495 = pneg %p334
        %p496 = pneg %p331
        %p497 = pneg %p362
        %p498 = pneg %p359
        %s499 = sand.u32 %s349, 1
        %s500 = scalar_lea.sflag [#allocation3], %s499
        %s501 = sand.u32 %s349, 1
        %s502 = smul.addr %s501, 8
        %s503 = scalar_lea.vmem [#allocation2], %s502
        %p504 = scmp.lt.s32.totalorder %s31, 1
        %s505 = scalar_select %p504, %s31, 1
        %p506 = scmp.lt.s32.totalorder %s32, 0
        %s507 = scalar_select %p506, %s32, 0
        %s508 = sadd.s32 %s507, %s505
        %s509 = smul.addr %s508, 8
        %s510 = scalar_lea.vmem %s0, %s509
        %p511 = scmp.lt.s32.totalorder %s31, 1
        %s512 = scalar_select %p511, %s31, 1
        %s513 = smul.addr %s512, 8
        %s514 = scalar_lea.vmem %s1, %s513
        %p515 = scmp.lt.s32.totalorder %s31, 1
        %s516 = scalar_select %p515, %s31, 1
        %s517 = smul.addr %s516, 8
        %s518 = scalar_lea.vmem %s2, %s517
        %p519 = scmp.lt.s32.totalorder %s31, 1
        %s520 = scalar_select %p519, %s31, 1
        %s521 = scalar_lea.vmem %s3, %s520
        %p522 = scmp.lt.s32.totalorder %s32, 0
        %s523 = scalar_select %p522, %s32, 0
        %s524 = smul.addr %s523, 2
        %s525 = scalar_lea.vmem %s4, %s524
        %v527 = vld [vmem:[%s510] sm:$0xff]
        %v528 = vpack.c.bf16 %v527, %v527
        %v529 = vld [vmem:[%s514] sm:$0xff]
        %v530 = vpack.c.bf16 %v529, %v529
        %v531 = vld [vmem:[%s518] sm:$0xff]
        %v532 = vpack.c.bf16 %v531, %v531
        %v533 = vld [vmem:[%s521] sm:$0x1]
        %v534 = vunpack.c.0.s8 %v533
        %v535 = vcvt.s32.f32 %v534
        %v536 = vld [vmem:[%s525] sm:$0x3]
        %v537 = vunpack.c.0.s8 %v536
        %v538 = vcvt.s32.f32 %v537
        %v539 = vlaneseq
        %v540 = vshrl.u32 %v539, 7
        %v541 = vsub.s32 0, %v540
        %v542 = vrot.slane %v535, %v541
        %v543 = vmax.f32 %v542, %v538
        %vm544 = vcmp.gt.f32.partialorder %v543, 0.0
        %v545 = vsel %vm544, -3.4028235e+38, 0.0
        %v546 = vld [vmem:[%s5] sm:$0xf]
        %v547 = vld [vmem:[%s5 + $0x4] sm:$0xf]
        %v548 = vld [vmem:[%s5 + $0x8] sm:$0xf]
        %v549 = vld [vmem:[%s5 + $0xc] sm:$0xf]
        %v550 = vld [vmem:[%s6] sm:$0x1]
        %v552 = vlaneseq
        %v553 = vshrl.u32 %v552, 7
        %v554 = vsub.s32 0, %v553
        %v555 = vrot.slane %v550, %v554
        %v561 = vunpack.c.l.b16 %v546
        %v562 = vunpack.c.l.b16 %v547
        %v563 = vunpack.c.l.b16 %v548
        %v564 = vunpack.c.l.b16 %v549
        %v565 = vpack.c.b16 %v562, %v561
        %v566 = vpack.c.b16 %v564, %v563
        %vm569 = vcmask 261120
        %v571 = vsel %vm569, %v528, 0
        %573 = vmatprep.subr.bf16.mxu0 0
        %574 = vmatpush1.bf16.msra.mxu0 0
        %575 = vmatprep.subr.bf16.mxu0 0
        %576 = vmatpush1.bf16.msra.mxu0 0
        %577 = vmatprep.subr.bf16.mxu0 0
        %578 = vmatpush1.bf16.msra.mxu0 0
        %579 = vmatprep.subr.bf16.mxu0 0
        %580 = vmatpush1.bf16.msra.mxu0 0
        %581 = vmatprep.subr.bf16.mxu0 0
        %582 = vmatpush1.bf16.msra.mxu0 0
        %583 = vmatprep.subr.bf16.mxu0 0
        %584 = vmatpush1.bf16.msra.mxu0 0
        %585 = vmatprep.subr.bf16.mxu0 0
        %586 = vmatpush1.bf16.msra.mxu0 %v566
        %587 = vmatprep.subr.bf16.mxu0 0
        %588 = vmatpush1.bf16.msra.mxu0 %v565
        %589 = vmatprep.subr.bf16.mxu0 0
        %590 = vmatpush2.bf16.msra.mxu0 0
        %591 = vmatprep.subr.bf16.mxu0 0
        %592 = vmatpush2.bf16.msra.mxu0 0
        %593 = vmatprep.subr.bf16.mxu0 0
        %594 = vmatpush2.bf16.msra.mxu0 0
        %595 = vmatprep.subr.bf16.mxu0 0
        %596 = vmatpush2.bf16.msra.mxu0 0
        %597 = vmatprep.subr.bf16.mxu0 0
        %598 = vmatpush2.bf16.msra.mxu0 0
        %599 = vmatprep.subr.bf16.mxu0 0
        %600 = vmatpush2.bf16.msra.mxu0 0
        %601 = vmatprep.subr.bf16.mxu0 0
        %602 = vmatpush2.bf16.msra.mxu0 0
        %603 = vmatprep.subr.bf16.mxu0 0
        %604 = vmatpush2.bf16.msra.mxu0 0
        %605 = vmatprep.mubr.bf16.mxu0 0
        %606 = vmatmul.mubr.bf16.gmra.mxu0 %v571
        %v607 = vpop.f32.mrf.mxu0
        %v608 = vadd.f32 %v555, %v607
        %v609 = vpop.f32.mrf.mxu0
        %v610 = vpop.f32.mrf.mxu0
        %v611 = vpop.f32.mrf.mxu0
        %612 = vdwg.mxu0
        %v613 = vld [vmem:[%s7] sm:$0xf]
        %v614 = vld [vmem:[%s7 + $0x4] sm:$0xf]
        %v615 = vld [vmem:[%s7 + $0x8] sm:$0xf]
        %v616 = vld [vmem:[%s7 + $0xc] sm:$0xf]
        %v617 = vld [vmem:[%s8] sm:$0x1]
        %v619 = vlaneseq
        %v620 = vshrl.u32 %v619, 7
        %v621 = vsub.s32 0, %v620
        %v622 = vrot.slane %v617, %v621
        %v628 = vunpack.c.l.b16 %v613
        %v629 = vunpack.c.l.b16 %v614
        %v630 = vunpack.c.l.b16 %v615
        %v631 = vunpack.c.l.b16 %v616
        %v632 = vpack.c.b16 %v629, %v628
        %v633 = vpack.c.b16 %v631, %v630
        %v637 = vsel %vm569, %v530, 0
        %639 = vmatprep.subr.bf16.mxu0 0
        %640 = vmatpush1.bf16.msra.mxu0 0
        %641 = vmatprep.subr.bf16.mxu0 0
        %642 = vmatpush1.bf16.msra.mxu0 0
        %643 = vmatprep.subr.bf16.mxu0 0
        %644 = vmatpush1.bf16.msra.mxu0 0
        %645 = vmatprep.subr.bf16.mxu0 0
        %646 = vmatpush1.bf16.msra.mxu0 0
        %647 = vmatprep.subr.bf16.mxu0 0
        %648 = vmatpush1.bf16.msra.mxu0 0
        %649 = vmatprep.subr.bf16.mxu0 0
        %650 = vmatpush1.bf16.msra.mxu0 0
        %651 = vmatprep.subr.bf16.mxu0 0
        %652 = vmatpush1.bf16.msra.mxu0 %v633
        %653 = vmatprep.subr.bf16.mxu0 0
        %654 = vmatpush1.bf16.msra.mxu0 %v632
        %655 = vmatprep.subr.bf16.mxu0 0
        %656 = vmatpush2.bf16.msra.mxu0 0
        %657 = vmatprep.subr.bf16.mxu0 0
        %658 = vmatpush2.bf16.msra.mxu0 0
        %659 = vmatprep.subr.bf16.mxu0 0
        %660 = vmatpush2.bf16.msra.mxu0 0
        %661 = vmatprep.subr.bf16.mxu0 0
        %662 = vmatpush2.bf16.msra.mxu0 0
        %663 = vmatprep.subr.bf16.mxu0 0
        %664 = vmatpush2.bf16.msra.mxu0 0
        %665 = vmatprep.subr.bf16.mxu0 0
        %666 = vmatpush2.bf16.msra.mxu0 0
        %667 = vmatprep.subr.bf16.mxu0 0
        %668 = vmatpush2.bf16.msra.mxu0 0
        %669 = vmatprep.subr.bf16.mxu0 0
        %670 = vmatpush2.bf16.msra.mxu0 0
        %671 = vmatprep.mubr.bf16.mxu0 0
        %672 = vmatmul.mubr.bf16.gmra.mxu0 %v637
        %v673 = vpop.f32.mrf.mxu0
        %v674 = vadd.f32 %v622, %v673
        %v675 = vpop.f32.mrf.mxu0
        %v676 = vpop.f32.mrf.mxu0
        %v677 = vpop.f32.mrf.mxu0
        %678 = vdwg.mxu0
        %v679 = vld [vmem:[%s9] sm:$0xf]
        %v680 = vld [vmem:[%s9 + $0x4] sm:$0xf]
        %v681 = vld [vmem:[%s9 + $0x8] sm:$0xf]
        %v682 = vld [vmem:[%s9 + $0xc] sm:$0xf]
        %v683 = vld [vmem:[%s10] sm:$0x1]
        %v685 = vlaneseq
        %v686 = vshrl.u32 %v685, 7
        %v687 = vsub.s32 0, %v686
        %v688 = vrot.slane %v683, %v687
        %v694 = vunpack.c.l.b16 %v679
        %v695 = vunpack.c.l.b16 %v680
        %v696 = vunpack.c.l.b16 %v681
        %v697 = vunpack.c.l.b16 %v682
        %v698 = vpack.c.b16 %v695, %v694
        %v699 = vpack.c.b16 %v697, %v696
        %v703 = vsel %vm569, %v532, 0
        %705 = vmatprep.subr.bf16.mxu0 0
        %706 = vmatpush1.bf16.msra.mxu0 0
        %707 = vmatprep.subr.bf16.mxu0 0
        %708 = vmatpush1.bf16.msra.mxu0 0
        %709 = vmatprep.subr.bf16.mxu0 0
        %710 = vmatpush1.bf16.msra.mxu0 0
        %711 = vmatprep.subr.bf16.mxu0 0
        %712 = vmatpush1.bf16.msra.mxu0 0
        %713 = vmatprep.subr.bf16.mxu0 0
        %714 = vmatpush1.bf16.msra.mxu0 0
        %715 = vmatprep.subr.bf16.mxu0 0
        %716 = vmatpush1.bf16.msra.mxu0 0
        %717 = vmatprep.subr.bf16.mxu0 0
        %718 = vmatpush1.bf16.msra.mxu0 %v699
        %719 = vmatprep.subr.bf16.mxu0 0
        %720 = vmatpush1.bf16.msra.mxu0 %v698
        %721 = vmatprep.subr.bf16.mxu0 0
        %722 = vmatpush2.bf16.msra.mxu0 0
        %723 = vmatprep.subr.bf16.mxu0 0
        %724 = vmatpush2.bf16.msra.mxu0 0
        %725 = vmatprep.subr.bf16.mxu0 0
        %726 = vmatpush2.bf16.msra.mxu0 0
        %727 = vmatprep.subr.bf16.mxu0 0
        %728 = vmatpush2.bf16.msra.mxu0 0
        %729 = vmatprep.subr.bf16.mxu0 0
        %730 = vmatpush2.bf16.msra.mxu0 0
        %731 = vmatprep.subr.bf16.mxu0 0
        %732 = vmatpush2.bf16.msra.mxu0 0
        %733 = vmatprep.subr.bf16.mxu0 0
        %734 = vmatpush2.bf16.msra.mxu0 0
        %735 = vmatprep.subr.bf16.mxu0 0
        %736 = vmatpush2.bf16.msra.mxu0 0
        %737 = vmatprep.mubr.bf16.mxu0 0
        %738 = vmatmul.mubr.bf16.gmra.mxu0 %v703
        %v739 = vpop.f32.mrf.mxu0
        %v740 = vadd.f32 %v688, %v739
        %v741 = vpop.f32.mrf.mxu0
        %v742 = vpop.f32.mrf.mxu0
        %v743 = vpop.f32.mrf.mxu0
        %744 = vdwg.mxu0
        %v745 = vpack.c.bf16 %v608, %v608
        %v746 = vpack.c.bf16 %v674, %v674
        %vm747 = vcmask 64512
        %v749 = vsel %vm747, %v745, 0
        %v752 = vsel %vm747, %v746, 0
        %754 = vmatprep.subr.bf16.mxu0 0
        %755 = vmatpush1.bf16.xpose.msra.mxu0 0
        %756 = vmatprep.subr.bf16.mxu0 0
        %757 = vmatpush1.bf16.xpose.msra.mxu0 0
        %758 = vmatprep.subr.bf16.mxu0 0
        %759 = vmatpush1.bf16.xpose.msra.mxu0 0
        %760 = vmatprep.subr.bf16.mxu0 0
        %761 = vmatpush1.bf16.xpose.msra.mxu0 0
        %762 = vmatprep.subr.bf16.mxu0 0
        %763 = vmatpush1.bf16.xpose.msra.mxu0 0
        %764 = vmatprep.subr.bf16.mxu0 0
        %765 = vmatpush1.bf16.xpose.msra.mxu0 0
        %766 = vmatprep.subr.bf16.mxu0 0
        %767 = vmatpush1.bf16.xpose.msra.mxu0 0
        %768 = vmatprep.subr.bf16.mxu0 0
        %769 = vmatpush1.bf16.xpose.msra.mxu0 %v752
        %770 = vmatprep.subr.bf16.mxu0 0
        %771 = vmatpush2.bf16.xpose.msra.mxu0 0
        %772 = vmatprep.subr.bf16.mxu0 0
        %773 = vmatpush2.bf16.xpose.msra.mxu0 0
        %774 = vmatprep.subr.bf16.mxu0 0
        %775 = vmatpush2.bf16.xpose.msra.mxu0 0
        %776 = vmatprep.subr.bf16.mxu0 0
        %777 = vmatpush2.bf16.xpose.msra.mxu0 0
        %778 = vmatprep.subr.bf16.mxu0 0
        %779 = vmatpush2.bf16.xpose.msra.mxu0 0
        %780 = vmatprep.subr.bf16.mxu0 0
        %781 = vmatpush2.bf16.xpose.msra.mxu0 0
        %782 = vmatprep.subr.bf16.mxu0 0
        %783 = vmatpush2.bf16.xpose.msra.mxu0 0
        %784 = vmatprep.subr.bf16.mxu0 0
        %785 = vmatpush2.bf16.xpose.msra.mxu0 0
        %786 = vmatprep.mubr.bf16.mxu0 0
        %787 = vmatmul.mubr.bf16.gmra.mxu0 %v749
        %v788 = vpop.f32.mrf.mxu0
        %v789 = vadd.f32 %v545, %v788
        %v790 = vpop.f32.mrf.mxu0
        %v791 = vpop.f32.mrf.mxu0
        %v792 = vpop.f32.mrf.mxu0
        %793 = vdwg.mxu0
        %v794 = vsel %vm747, %v789, -inf
        %795 = vmax.xlane.f32.xlu0 %v794
        %v796 = vpop.xlane.xlu0 %795
        %v797 = vsub.f32 %v789, %v796
        %v798 = vmul.f32 %v797, 1.442695
        %v799 = vpow.pop %v798
        %v800 = vsel %vm747, %v799, 0.0
        %801 = vadd.xlane.f32.xlu0 %v800
        %v802 = vpop.xlane.xlu0 %801
        %v803 = vrcp.pop %v802
        %v804 = vmul.f32 %v799, %v803
        %v805 = vpack.c.bf16 %v804, %v804
        %v806 = vpack.c.bf16 %v740, %v740
        %v808 = vsel %vm747, %v805, 0
        %vm810 = vcmask 1043456
        %v812 = vsel %vm810, %v806, 0
        %814 = vmatprep.subr.bf16.mxu0 0
        %815 = vmatpush1.bf16.msra.mxu0 0
        %816 = vmatprep.subr.bf16.mxu0 0
        %817 = vmatpush1.bf16.msra.mxu0 0
        %818 = vmatprep.subr.bf16.mxu0 0
        %819 = vmatpush1.bf16.msra.mxu0 0
        %820 = vmatprep.subr.bf16.mxu0 0
        %821 = vmatpush1.bf16.msra.mxu0 0
        %822 = vmatprep.subr.bf16.mxu0 0
        %823 = vmatpush1.bf16.msra.mxu0 0
        %824 = vmatprep.subr.bf16.mxu0 0
        %825 = vmatpush1.bf16.msra.mxu0 0
        %826 = vmatprep.subr.bf16.mxu0 0
        %827 = vmatpush1.bf16.msra.mxu0 0
        %828 = vmatprep.subr.bf16.mxu0 0
        %829 = vmatpush1.bf16.msra.mxu0 %v812
        %830 = vmatprep.subr.bf16.mxu0 0
        %831 = vmatpush2.bf16.msra.mxu0 0
        %832 = vmatprep.subr.bf16.mxu0 0
        %833 = vmatpush2.bf16.msra.mxu0 0
        %834 = vmatprep.subr.bf16.mxu0 0
        %835 = vmatpush2.bf16.msra.mxu0 0
        %836 = vmatprep.subr.bf16.mxu0 0
        %837 = vmatpush2.bf16.msra.mxu0 0
        %838 = vmatprep.subr.bf16.mxu0 0
        %839 = vmatpush2.bf16.msra.mxu0 0
        %840 = vmatprep.subr.bf16.mxu0 0
        %841 = vmatpush2.bf16.msra.mxu0 0
        %842 = vmatprep.subr.bf16.mxu0 0
        %843 = vmatpush2.bf16.msra.mxu0 0
        %844 = vmatprep.subr.bf16.mxu0 0
        %845 = vmatpush2.bf16.msra.mxu0 0
        %846 = vmatprep.mubr.bf16.mxu0 0
        %847 = vmatmul.mubr.bf16.gmra.mxu0 %v808
        %v848 = vpop.f32.mrf.mxu0
        %v849 = vadd.f32 0.0, %v848
        %v850 = vpop.f32.mrf.mxu0
        %v851 = vpop.f32.mrf.mxu0
        %v852 = vpop.f32.mrf.mxu0
        %853 = vdwg.mxu0
        %v854 = vpack.c.bf16 %v849, %v849
        %v855 = vld [vmem:[%s11] sm:$0xf]
        %s856 = scalar_lea.vmem %s5, 16
        %v857 = vld [vmem:[%s856] sm:$0xf]
        %v858 = vld [vmem:[%s856 + $0x4] sm:$0xf]
        %v859 = vld [vmem:[%s856 + $0x8] sm:$0xf]
        %v860 = vld [vmem:[%s856 + $0xc] sm:$0xf]
        %s861 = scalar_lea.vmem %s6, 1
        %v862 = vld [vmem:[%s861] sm:$0x1]
        %v864 = vlaneseq
        %v865 = vshrl.u32 %v864, 7
        %v866 = vsub.s32 0, %v865
        %v867 = vrot.slane %v862, %v866
        %v873 = vunpack.c.l.b16 %v857
        %v874 = vunpack.c.l.b16 %v858
        %v875 = vunpack.c.l.b16 %v859
        %v876 = vunpack.c.l.b16 %v860
        %v877 = vpack.c.b16 %v874, %v873
        %v878 = vpack.c.b16 %v876, %v875
        %881 = vmatprep.subr.bf16.mxu0 0
        %882 = vmatpush1.bf16.msra.mxu0 0
        %883 = vmatprep.subr.bf16.mxu0 0
        %884 = vmatpush1.bf16.msra.mxu0 0
        %885 = vmatprep.subr.bf16.mxu0 0
        %886 = vmatpush1.bf16.msra.mxu0 0
        %887 = vmatprep.subr.bf16.mxu0 0
        %888 = vmatpush1.bf16.msra.mxu0 0
        %889 = vmatprep.subr.bf16.mxu0 0
        %890 = vmatpush1.bf16.msra.mxu0 0
        %891 = vmatprep.subr.bf16.mxu0 0
        %892 = vmatpush1.bf16.msra.mxu0 0
        %893 = vmatprep.subr.bf16.mxu0 0
        %894 = vmatpush1.bf16.msra.mxu0 %v878
        %895 = vmatprep.subr.bf16.mxu0 0
        %896 = vmatpush1.bf16.msra.mxu0 %v877
        %897 = vmatprep.subr.bf16.mxu0 0
        %898 = vmatpush2.bf16.msra.mxu0 0
        %899 = vmatprep.subr.bf16.mxu0 0
        %900 = vmatpush2.bf16.msra.mxu0 0
        %901 = vmatprep.subr.bf16.mxu0 0
        %902 = vmatpush2.bf16.msra.mxu0 0
        %903 = vmatprep.subr.bf16.mxu0 0
        %904 = vmatpush2.bf16.msra.mxu0 0
        %905 = vmatprep.subr.bf16.mxu0 0
        %906 = vmatpush2.bf16.msra.mxu0 0
        %907 = vmatprep.subr.bf16.mxu0 0
        %908 = vmatpush2.bf16.msra.mxu0 0
        %909 = vmatprep.subr.bf16.mxu0 0
        %910 = vmatpush2.bf16.msra.mxu0 0
        %911 = vmatprep.subr.bf16.mxu0 0
        %912 = vmatpush2.bf16.msra.mxu0 0
        %913 = vmatprep.mubr.bf16.mxu0 0
        %914 = vmatmul.mubr.bf16.gmra.mxu0 %v571
        %v915 = vpop.f32.mrf.mxu0
        %v916 = vadd.f32 %v867, %v915
        %v917 = vpop.f32.mrf.mxu0
        %v918 = vpop.f32.mrf.mxu0
        %v919 = vpop.f32.mrf.mxu0
        %920 = vdwg.mxu0
        %s921 = scalar_lea.vmem %s7, 16
        %v922 = vld [vmem:[%s921] sm:$0xf]
        %v923 = vld [vmem:[%s921 + $0x4] sm:$0xf]
        %v924 = vld [vmem:[%s921 + $0x8] sm:$0xf]
        %v925 = vld [vmem:[%s921 + $0xc] sm:$0xf]
        %s926 = scalar_lea.vmem %s8, 1
        %v927 = vld [vmem:[%s926] sm:$0x1]
        %v929 = vlaneseq
        %v930 = vshrl.u32 %v929, 7
        %v931 = vsub.s32 0, %v930
        %v932 = vrot.slane %v927, %v931
        %v938 = vunpack.c.l.b16 %v922
        %v939 = vunpack.c.l.b16 %v923
        %v940 = vunpack.c.l.b16 %v924
        %v941 = vunpack.c.l.b16 %v925
        %v942 = vpack.c.b16 %v939, %v938
        %v943 = vpack.c.b16 %v941, %v940
        %946 = vmatprep.subr.bf16.mxu0 0
        %947 = vmatpush1.bf16.msra.mxu0 0
        %948 = vmatprep.subr.bf16.mxu0 0
        %949 = vmatpush1.bf16.msra.mxu0 0
        %950 = vmatprep.subr.bf16.mxu0 0
        %951 = vmatpush1.bf16.msra.mxu0 0
        %952 = vmatprep.subr.bf16.mxu0 0
        %953 = vmatpush1.bf16.msra.mxu0 0
        %954 = vmatprep.subr.bf16.mxu0 0
        %955 = vmatpush1.bf16.msra.mxu0 0
        %956 = vmatprep.subr.bf16.mxu0 0
        %957 = vmatpush1.bf16.msra.mxu0 0
        %958 = vmatprep.subr.bf16.mxu0 0
        %959 = vmatpush1.bf16.msra.mxu0 %v943
        %960 = vmatprep.subr.bf16.mxu0 0
        %961 = vmatpush1.bf16.msra.mxu0 %v942
        %962 = vmatprep.subr.bf16.mxu0 0
        %963 = vmatpush2.bf16.msra.mxu0 0
        %964 = vmatprep.subr.bf16.mxu0 0
        %965 = vmatpush2.bf16.msra.mxu0 0
        %966 = vmatprep.subr.bf16.mxu0 0
        %967 = vmatpush2.bf16.msra.mxu0 0
        %968 = vmatprep.subr.bf16.mxu0 0
        %969 = vmatpush2.bf16.msra.mxu0 0
        %970 = vmatprep.subr.bf16.mxu0 0
        %971 = vmatpush2.bf16.msra.mxu0 0
        %972 = vmatprep.subr.bf16.mxu0 0
        %973 = vmatpush2.bf16.msra.mxu0 0
        %974 = vmatprep.subr.bf16.mxu0 0
        %975 = vmatpush2.bf16.msra.mxu0 0
        %976 = vmatprep.subr.bf16.mxu0 0
        %977 = vmatpush2.bf16.msra.mxu0 0
        %978 = vmatprep.mubr.bf16.mxu0 0
        %979 = vmatmul.mubr.bf16.gmra.mxu0 %v637
        %v980 = vpop.f32.mrf.mxu0
        %v981 = vadd.f32 %v932, %v980
        %v982 = vpop.f32.mrf.mxu0
        %v983 = vpop.f32.mrf.mxu0
        %v984 = vpop.f32.mrf.mxu0
        %985 = vdwg.mxu0
        %s986 = scalar_lea.vmem %s9, 16
        %v987 = vld [vmem:[%s986] sm:$0xf]
        %v988 = vld [vmem:[%s986 + $0x4] sm:$0xf]
        %v989 = vld [vmem:[%s986 + $0x8] sm:$0xf]
        %v990 = vld [vmem:[%s986 + $0xc] sm:$0xf]
        %s991 = scalar_lea.vmem %s10, 1
        %v992 = vld [vmem:[%s991] sm:$0x1]
        %v994 = vlaneseq
        %v995 = vshrl.u32 %v994, 7
        %v996 = vsub.s32 0, %v995
        %v997 = vrot.slane %v992, %v996
        %v1003 = vunpack.c.l.b16 %v987
        %v1004 = vunpack.c.l.b16 %v988
        %v1005 = vunpack.c.l.b16 %v989
        %v1006 = vunpack.c.l.b16 %v990
        %v1007 = vpack.c.b16 %v1004, %v1003
        %v1008 = vpack.c.b16 %v1006, %v1005
        %1011 = vmatprep.subr.bf16.mxu0 0
        %1012 = vmatpush1.bf16.msra.mxu0 0
        %1013 = vmatprep.subr.bf16.mxu0 0
        %1014 = vmatpush1.bf16.msra.mxu0 0
        %1015 = vmatprep.subr.bf16.mxu0 0
        %1016 = vmatpush1.bf16.msra.mxu0 0
        %1017 = vmatprep.subr.bf16.mxu0 0
        %1018 = vmatpush1.bf16.msra.mxu0 0
        %1019 = vmatprep.subr.bf16.mxu0 0
        %1020 = vmatpush1.bf16.msra.mxu0 0
        %1021 = vmatprep.subr.bf16.mxu0 0
        %1022 = vmatpush1.bf16.msra.mxu0 0
        %1023 = vmatprep.subr.bf16.mxu0 0
        %1024 = vmatpush1.bf16.msra.mxu0 %v1008
        %1025 = vmatprep.subr.bf16.mxu0 0
        %1026 = vmatpush1.bf16.msra.mxu0 %v1007
        %1027 = vmatprep.subr.bf16.mxu0 0
        %1028 = vmatpush2.bf16.msra.mxu0 0
        %1029 = vmatprep.subr.bf16.mxu0 0
        %1030 = vmatpush2.bf16.msra.mxu0 0
        %1031 = vmatprep.subr.bf16.mxu0 0
        %1032 = vmatpush2.bf16.msra.mxu0 0
        %1033 = vmatprep.subr.bf16.mxu0 0
        %1034 = vmatpush2.bf16.msra.mxu0 0
        %1035 = vmatprep.subr.bf16.mxu0 0
        %1036 = vmatpush2.bf16.msra.mxu0 0
        %1037 = vmatprep.subr.bf16.mxu0 0
        %1038 = vmatpush2.bf16.msra.mxu0 0
        %1039 = vmatprep.subr.bf16.mxu0 0
        %1040 = vmatpush2.bf16.msra.mxu0 0
        %1041 = vmatprep.subr.bf16.mxu0 0
        %1042 = vmatpush2.bf16.msra.mxu0 0
        %1043 = vmatprep.mubr.bf16.mxu0 0
        %1044 = vmatmul.mubr.bf16.gmra.mxu0 %v703
        %v1045 = vpop.f32.mrf.mxu0
        %v1046 = vadd.f32 %v997, %v1045
        %v1047 = vpop.f32.mrf.mxu0
        %v1048 = vpop.f32.mrf.mxu0
        %v1049 = vpop.f32.mrf.mxu0
        %1050 = vdwg.mxu0
        %v1051 = vpack.c.bf16 %v916, %v916
        %v1052 = vpack.c.bf16 %v981, %v981
        %v1054 = vsel %vm747, %v1051, 0
        %v1057 = vsel %vm747, %v1052, 0
        %1059 = vmatprep.subr.bf16.mxu0 0
        %1060 = vmatpush1.bf16.xpose.msra.mxu0 0
        %1061 = vmatprep.subr.bf16.mxu0 0
        %1062 = vmatpush1.bf16.xpose.msra.mxu0 0
        %1063 = vmatprep.subr.bf16.mxu0 0
        %1064 = vmatpush1.bf16.xpose.msra.mxu0 0
        %1065 = vmatprep.subr.bf16.mxu0 0
        %1066 = vmatpush1.bf16.xpose.msra.mxu0 0
        %1067 = vmatprep.subr.bf16.mxu0 0
        %1068 = vmatpush1.bf16.xpose.msra.mxu0 0
        %1069 = vmatprep.subr.bf16.mxu0 0
        %1070 = vmatpush1.bf16.xpose.msra.mxu0 0
        %1071 = vmatprep.subr.bf16.mxu0 0
        %1072 = vmatpush1.bf16.xpose.msra.mxu0 0
        %1073 = vmatprep.subr.bf16.mxu0 0
        %1074 = vmatpush1.bf16.xpose.msra.mxu0 %v1057
        %1075 = vmatprep.subr.bf16.mxu0 0
        %1076 = vmatpush2.bf16.xpose.msra.mxu0 0
        %1077 = vmatprep.subr.bf16.mxu0 0
        %1078 = vmatpush2.bf16.xpose.msra.mxu0 0
        %1079 = vmatprep.subr.bf16.mxu0 0
        %1080 = vmatpush2.bf16.xpose.msra.mxu0 0
        %1081 = vmatprep.subr.bf16.mxu0 0
        %1082 = vmatpush2.bf16.xpose.msra.mxu0 0
        %1083 = vmatprep.subr.bf16.mxu0 0
        %1084 = vmatpush2.bf16.xpose.msra.mxu0 0
        %1085 = vmatprep.subr.bf16.mxu0 0
        %1086 = vmatpush2.bf16.xpose.msra.mxu0 0
        %1087 = vmatprep.subr.bf16.mxu0 0
        %1088 = vmatpush2.bf16.xpose.msra.mxu0 0
        %1089 = vmatprep.subr.bf16.mxu0 0
        %1090 = vmatpush2.bf16.xpose.msra.mxu0 0
        %1091 = vmatprep.mubr.bf16.mxu0 0
        %1092 = vmatmul.mubr.bf16.gmra.mxu0 %v1054
        %v1093 = vpop.f32.mrf.mxu0
        %v1094 = vadd.f32 %v545, %v1093
        %v1095 = vpop.f32.mrf.mxu0
        %v1096 = vpop.f32.mrf.mxu0
        %v1097 = vpop.f32.mrf.mxu0
        %1098 = vdwg.mxu0
        %v1099 = vsel %vm747, %v1094, -inf
        %1100 = vmax.xlane.f32.xlu0 %v1099
        %v1101 = vpop.xlane.xlu0 %1100
        %v1102 = vsub.f32 %v1094, %v1101
        %v1103 = vmul.f32 %v1102, 1.442695
        %v1104 = vpow.pop %v1103
        %v1105 = vsel %vm747, %v1104, 0.0
        %1106 = vadd.xlane.f32.xlu0 %v1105
        %v1107 = vpop.xlane.xlu0 %1106
        %v1108 = vrcp.pop %v1107
        %v1109 = vmul.f32 %v1104, %v1108
        %v1110 = vpack.c.bf16 %v1109, %v1109
        %v1111 = vpack.c.bf16 %v1046, %v1046
        %v1113 = vsel %vm747, %v1110, 0
        %v1116 = vsel %vm810, %v1111, 0
        %1118 = vmatprep.subr.bf16.mxu0 0
        %1119 = vmatpush1.bf16.msra.mxu0 0
        %1120 = vmatprep.subr.bf16.mxu0 0
        %1121 = vmatpush1.bf16.msra.mxu0 0
        %1122 = vmatprep.subr.bf16.mxu0 0
        %1123 = vmatpush1.bf16.msra.mxu0 0
        %1124 = vmatprep.subr.bf16.mxu0 0
        %1125 = vmatpush1.bf16.msra.mxu0 0
        %1126 = vmatprep.subr.bf16.mxu0 0
        %1127 = vmatpush1.bf16.msra.mxu0 0
        %1128 = vmatprep.subr.bf16.mxu0 0
        %1129 = vmatpush1.bf16.msra.mxu0 0
        %1130 = vmatprep.subr.bf16.mxu0 0
        %1131 = vmatpush1.bf16.msra.mxu0 0
        %1132 = vmatprep.subr.bf16.mxu0 0
        %1133 = vmatpush1.bf16.msra.mxu0 %v1116
        %1134 = vmatprep.subr.bf16.mxu0 0
        %1135 = vmatpush2.bf16.msra.mxu0 0
        %1136 = vmatprep.subr.bf16.mxu0 0
        %1137 = vmatpush2.bf16.msra.mxu0 0
        %1138 = vmatprep.subr.bf16.mxu0 0
        %1139 = vmatpush2.bf16.msra.mxu0 0
        %1140 = vmatprep.subr.bf16.mxu0 0
        %1141 = vmatpush2.bf16.msra.mxu0 0
        %1142 = vmatprep.subr.bf16.mxu0 0
        %1143 = vmatpush2.bf16.msra.mxu0 0
        %1144 = vmatprep.subr.bf16.mxu0 0
        %1145 = vmatpush2.bf16.msra.mxu0 0
        %1146 = vmatprep.subr.bf16.mxu0 0
        %1147 = vmatpush2.bf16.msra.mxu0 0
        %1148 = vmatprep.subr.bf16.mxu0 0
        %1149 = vmatpush2.bf16.msra.mxu0 0
        %1150 = vmatprep.mubr.bf16.mxu0 0
        %1151 = vmatmul.mubr.bf16.gmra.mxu0 %v1113
        %v1152 = vpop.f32.mrf.mxu0
        %v1153 = vadd.f32 0.0, %v1152
        %v1154 = vpop.f32.mrf.mxu0
        %v1155 = vpop.f32.mrf.mxu0
        %v1156 = vpop.f32.mrf.mxu0
        %1157 = vdwg.mxu0
        %v1158 = vpack.c.bf16 %v1153, %v1153
        %s1159 = scalar_lea.vmem %s11, 4
        %v1160 = vld [vmem:[%s1159] sm:$0xf]
        %v1162 = vsel %vm747, %v1158, 0
        %v1165 = vsel %vm810, %v1160, 0
        %1167 = vmatprep.subr.bf16.mxu0 0
        %1168 = vmatpush1.bf16.msra.mxu0 0
        %1169 = vmatprep.subr.bf16.mxu0 0
        %1170 = vmatpush1.bf16.msra.mxu0 0
        %1171 = vmatprep.subr.bf16.mxu0 0
        %1172 = vmatpush1.bf16.msra.mxu0 0
        %1173 = vmatprep.subr.bf16.mxu0 0
        %1174 = vmatpush1.bf16.msra.mxu0 0
        %1175 = vmatprep.subr.bf16.mxu0 0
        %1176 = vmatpush1.bf16.msra.mxu0 0
        %1177 = vmatprep.subr.bf16.mxu0 0
        %1178 = vmatpush1.bf16.msra.mxu0 0
        %1179 = vmatprep.subr.bf16.mxu0 0
        %1180 = vmatpush1.bf16.msra.mxu0 0
        %1181 = vmatprep.subr.bf16.mxu0 0
        %1182 = vmatpush1.bf16.msra.mxu0 %v1165
        %1183 = vmatprep.subr.bf16.mxu0 0
        %1184 = vmatpush2.bf16.msra.mxu0 0
        %1185 = vmatprep.subr.bf16.mxu0 0
        %1186 = vmatpush2.bf16.msra.mxu0 0
        %1187 = vmatprep.subr.bf16.mxu0 0
        %1188 = vmatpush2.bf16.msra.mxu0 0
        %1189 = vmatprep.subr.bf16.mxu0 0
        %1190 = vmatpush2.bf16.msra.mxu0 0
        %1191 = vmatprep.subr.bf16.mxu0 0
        %1192 = vmatpush2.bf16.msra.mxu0 0
        %1193 = vmatprep.subr.bf16.mxu0 0
        %1194 = vmatpush2.bf16.msra.mxu0 0
        %1195 = vmatprep.subr.bf16.mxu0 0
        %1196 = vmatpush2.bf16.msra.mxu0 0
        %1197 = vmatprep.subr.bf16.mxu0 0
        %1198 = vmatpush2.bf16.msra.mxu0 0
        %1199 = vmatprep.mubr.bf16.mxu0 0
        %1200 = vmatmul.mubr.bf16.gmra.mxu0 %v1162
        %v1201 = vpop.f32.mrf.mxu0
        %v1202 = vadd.f32 0.0, %v1201
        %v1203 = vpop.f32.mrf.mxu0
        %v1204 = vpop.f32.mrf.mxu0
        %v1205 = vpop.f32.mrf.mxu0
        %1206 = vdwg.mxu0
        %v1208 = vsel %vm747, %v854, 0
        %v1211 = vsel %vm810, %v855, 0
        %1213 = vmatprep.subr.bf16.mxu0 0
        %1214 = vmatpush1.bf16.msra.mxu0 0
        %1215 = vmatprep.subr.bf16.mxu0 0
        %1216 = vmatpush1.bf16.msra.mxu0 0
        %1217 = vmatprep.subr.bf16.mxu0 0
        %1218 = vmatpush1.bf16.msra.mxu0 0
        %1219 = vmatprep.subr.bf16.mxu0 0
        %1220 = vmatpush1.bf16.msra.mxu0 0
        %1221 = vmatprep.subr.bf16.mxu0 0
        %1222 = vmatpush1.bf16.msra.mxu0 0
        %1223 = vmatprep.subr.bf16.mxu0 0
        %1224 = vmatpush1.bf16.msra.mxu0 0
        %1225 = vmatprep.subr.bf16.mxu0 0
        %1226 = vmatpush1.bf16.msra.mxu0 0
        %1227 = vmatprep.subr.bf16.mxu0 0
        %1228 = vmatpush1.bf16.msra.mxu0 %v1211
        %1229 = vmatprep.subr.bf16.mxu0 0
        %1230 = vmatpush2.bf16.msra.mxu0 0
        %1231 = vmatprep.subr.bf16.mxu0 0
        %1232 = vmatpush2.bf16.msra.mxu0 0
        %1233 = vmatprep.subr.bf16.mxu0 0
        %1234 = vmatpush2.bf16.msra.mxu0 0
        %1235 = vmatprep.subr.bf16.mxu0 0
        %1236 = vmatpush2.bf16.msra.mxu0 0
        %1237 = vmatprep.subr.bf16.mxu0 0
        %1238 = vmatpush2.bf16.msra.mxu0 0
        %1239 = vmatprep.subr.bf16.mxu0 0
        %1240 = vmatpush2.bf16.msra.mxu0 0
        %1241 = vmatprep.subr.bf16.mxu0 0
        %1242 = vmatpush2.bf16.msra.mxu0 0
        %1243 = vmatprep.subr.bf16.mxu0 0
        %1244 = vmatpush2.bf16.msra.mxu0 0
        %1245 = vmatprep.mubr.bf16.mxu0 0
        %1246 = vmatmul.mubr.bf16.gmra.mxu0 %v1208
        %v1247 = vpop.f32.mrf.mxu0
        %v1248 = vadd.f32 %v1202, %v1247
        %v1249 = vpop.f32.mrf.mxu0
        %v1250 = vpop.f32.mrf.mxu0
        %v1251 = vpop.f32.mrf.mxu0
        %1252 = vdwg.mxu0
        %s1253 = scalar_lea.vmem %s5, 32
        %v1254 = vld [vmem:[%s1253] sm:$0xf]
        %v1255 = vld [vmem:[%s1253 + $0x4] sm:$0xf]
        %v1256 = vld [vmem:[%s1253 + $0x8] sm:$0xf]
        %v1257 = vld [vmem:[%s1253 + $0xc] sm:$0xf]
        %s1258 = scalar_lea.vmem %s6, 2
        %v1259 = vld [vmem:[%s1258] sm:$0x1]
        %v1261 = vlaneseq
        %v1262 = vshrl.u32 %v1261, 7
        %v1263 = vsub.s32 0, %v1262
        %v1264 = vrot.slane %v1259, %v1263
        %v1270 = vunpack.c.l.b16 %v1254
        %v1271 = vunpack.c.l.b16 %v1255
        %v1272 = vunpack.c.l.b16 %v1256
        %v1273 = vunpack.c.l.b16 %v1257
        %v1274 = vpack.c.b16 %v1271, %v1270
        %v1275 = vpack.c.b16 %v1273, %v1272
        %1278 = vmatprep.subr.bf16.mxu0 0
        %1279 = vmatpush1.bf16.msra.mxu0 0
        %1280 = vmatprep.subr.bf16.mxu0 0
        %1281 = vmatpush1.bf16.msra.mxu0 0
        %1282 = vmatprep.subr.bf16.mxu0 0
        %1283 = vmatpush1.bf16.msra.mxu0 0
        %1284 = vmatprep.subr.bf16.mxu0 0
        %1285 = vmatpush1.bf16.msra.mxu0 0
        %1286 = vmatprep.subr.bf16.mxu0 0
        %1287 = vmatpush1.bf16.msra.mxu0 0
        %1288 = vmatprep.subr.bf16.mxu0 0
        %1289 = vmatpush1.bf16.msra.mxu0 0
        %1290 = vmatprep.subr.bf16.mxu0 0
        %1291 = vmatpush1.bf16.msra.mxu0 %v1275
        %1292 = vmatprep.subr.bf16.mxu0 0
        %1293 = vmatpush1.bf16.msra.mxu0 %v1274
        %1294 = vmatprep.subr.bf16.mxu0 0
        %1295 = vmatpush2.bf16.msra.mxu0 0
        %1296 = vmatprep.subr.bf16.mxu0 0
        %1297 = vmatpush2.bf16.msra.mxu0 0
        %1298 = vmatprep.subr.bf16.mxu0 0
        %1299 = vmatpush2.bf16.msra.mxu0 0
        %1300 = vmatprep.subr.bf16.mxu0 0
        %1301 = vmatpush2.bf16.msra.mxu0 0
        %1302 = vmatprep.subr.bf16.mxu0 0
        %1303 = vmatpush2.bf16.msra.mxu0 0
        %1304 = vmatprep.subr.bf16.mxu0 0
        %1305 = vmatpush2.bf16.msra.mxu0 0
        %1306 = vmatprep.subr.bf16.mxu0 0
        %1307 = vmatpush2.bf16.msra.mxu0 0
        %1308 = vmatprep.subr.bf16.mxu0 0
        %1309 = vmatpush2.bf16.msra.mxu0 0
        %1310 = vmatprep.mubr.bf16.mxu0 0
        %1311 = vmatmul.mubr.bf16.gmra.mxu0 %v571
        %v1312 = vpop.f32.mrf.mxu0
        %v1313 = vadd.f32 %v1264, %v1312
        %v1314 = vpop.f32.mrf.mxu0
        %v1315 = vpop.f32.mrf.mxu0
        %v1316 = vpop.f32.mrf.mxu0
        %1317 = vdwg.mxu0
        %s1318 = scalar_lea.vmem %s7, 32
        %v1319 = vld [vmem:[%s1318] sm:$0xf]
        %v1320 = vld [vmem:[%s1318 + $0x4] sm:$0xf]
        %v1321 = vld [vmem:[%s1318 + $0x8] sm:$0xf]
        %v1322 = vld [vmem:[%s1318 + $0xc] sm:$0xf]
        %s1323 = scalar_lea.vmem %s8, 2
        %v1324 = vld [vmem:[%s1323] sm:$0x1]
        %v1326 = vlaneseq
        %v1327 = vshrl.u32 %v1326, 7
        %v1328 = vsub.s32 0, %v1327
        %v1329 = vrot.slane %v1324, %v1328
        %v1335 = vunpack.c.l.b16 %v1319
        %v1336 = vunpack.c.l.b16 %v1320
        %v1337 = vunpack.c.l.b16 %v1321
        %v1338 = vunpack.c.l.b16 %v1322
        %v1339 = vpack.c.b16 %v1336, %v1335
        %v1340 = vpack.c.b16 %v1338, %v1337
        %1343 = vmatprep.subr.bf16.mxu0 0
        %1344 = vmatpush1.bf16.msra.mxu0 0
        %1345 = vmatprep.subr.bf16.mxu0 0
        %1346 = vmatpush1.bf16.msra.mxu0 0
        %1347 = vmatprep.subr.bf16.mxu0 0
        %1348 = vmatpush1.bf16.msra.mxu0 0
        %1349 = vmatprep.subr.bf16.mxu0 0
        %1350 = vmatpush1.bf16.msra.mxu0 0
        %1351 = vmatprep.subr.bf16.mxu0 0
        %1352 = vmatpush1.bf16.msra.mxu0 0
        %1353 = vmatprep.subr.bf16.mxu0 0
        %1354 = vmatpush1.bf16.msra.mxu0 0
        %1355 = vmatprep.subr.bf16.mxu0 0
        %1356 = vmatpush1.bf16.msra.mxu0 %v1340
        %1357 = vmatprep.subr.bf16.mxu0 0
        %1358 = vmatpush1.bf16.msra.mxu0 %v1339
        %1359 = vmatprep.subr.bf16.mxu0 0
        %1360 = vmatpush2.bf16.msra.mxu0 0
        %1361 = vmatprep.subr.bf16.mxu0 0
        %1362 = vmatpush2.bf16.msra.mxu0 0
        %1363 = vmatprep.subr.bf16.mxu0 0
        %1364 = vmatpush2.bf16.msra.mxu0 0
        %1365 = vmatprep.subr.bf16.mxu0 0
        %1366 = vmatpush2.bf16.msra.mxu0 0
        %1367 = vmatprep.subr.bf16.mxu0 0
        %1368 = vmatpush2.bf16.msra.mxu0 0
        %1369 = vmatprep.subr.bf16.mxu0 0
        %1370 = vmatpush2.bf16.msra.mxu0 0
        %1371 = vmatprep.subr.bf16.mxu0 0
        %1372 = vmatpush2.bf16.msra.mxu0 0
        %1373 = vmatprep.subr.bf16.mxu0 0
        %1374 = vmatpush2.bf16.msra.mxu0 0
        %1375 = vmatprep.mubr.bf16.mxu0 0
        %1376 = vmatmul.mubr.bf16.gmra.mxu0 %v637
        %v1377 = vpop.f32.mrf.mxu0
        %v1378 = vadd.f32 %v1329, %v1377
        %v1379 = vpop.f32.mrf.mxu0
        %v1380 = vpop.f32.mrf.mxu0
        %v1381 = vpop.f32.mrf.mxu0
        %1382 = vdwg.mxu0
        %s1383 = scalar_lea.vmem %s9, 32
        %v1384 = vld [vmem:[%s1383] sm:$0xf]
        %v1385 = vld [vmem:[%s1383 + $0x4] sm:$0xf]
        %v1386 = vld [vmem:[%s1383 + $0x8] sm:$0xf]
        %v1387 = vld [vmem:[%s1383 + $0xc] sm:$0xf]
        %s1388 = scalar_lea.vmem %s10, 2
        %v1389 = vld [vmem:[%s1388] sm:$0x1]
        %v1391 = vlaneseq
        %v1392 = vshrl.u32 %v1391, 7
        %v1393 = vsub.s32 0, %v1392
        %v1394 = vrot.slane %v1389, %v1393
        %v1400 = vunpack.c.l.b16 %v1384
        %v1401 = vunpack.c.l.b16 %v1385
        %v1402 = vunpack.c.l.b16 %v1386
        %v1403 = vunpack.c.l.b16 %v1387
        %v1404 = vpack.c.b16 %v1401, %v1400
        %v1405 = vpack.c.b16 %v1403, %v1402
        %1408 = vmatprep.subr.bf16.mxu0 0
        %1409 = vmatpush1.bf16.msra.mxu0 0
        %1410 = vmatprep.subr.bf16.mxu0 0
        %1411 = vmatpush1.bf16.msra.mxu0 0
        %1412 = vmatprep.subr.bf16.mxu0 0
        %1413 = vmatpush1.bf16.msra.mxu0 0
        %1414 = vmatprep.subr.bf16.mxu0 0
        %1415 = vmatpush1.bf16.msra.mxu0 0
        %1416 = vmatprep.subr.bf16.mxu0 0
        %1417 = vmatpush1.bf16.msra.mxu0 0
        %1418 = vmatprep.subr.bf16.mxu0 0
        %1419 = vmatpush1.bf16.msra.mxu0 0
        %1420 = vmatprep.subr.bf16.mxu0 0
        %1421 = vmatpush1.bf16.msra.mxu0 %v1405
        %1422 = vmatprep.subr.bf16.mxu0 0
        %1423 = vmatpush1.bf16.msra.mxu0 %v1404
        %1424 = vmatprep.subr.bf16.mxu0 0
        %1425 = vmatpush2.bf16.msra.mxu0 0
        %1426 = vmatprep.subr.bf16.mxu0 0
        %1427 = vmatpush2.bf16.msra.mxu0 0
        %1428 = vmatprep.subr.bf16.mxu0 0
        %1429 = vmatpush2.bf16.msra.mxu0 0
        %1430 = vmatprep.subr.bf16.mxu0 0
        %1431 = vmatpush2.bf16.msra.mxu0 0
        %1432 = vmatprep.subr.bf16.mxu0 0
        %1433 = vmatpush2.bf16.msra.mxu0 0
        %1434 = vmatprep.subr.bf16.mxu0 0
        %1435 = vmatpush2.bf16.msra.mxu0 0
        %1436 = vmatprep.subr.bf16.mxu0 0
        %1437 = vmatpush2.bf16.msra.mxu0 0
        %1438 = vmatprep.subr.bf16.mxu0 0
        %1439 = vmatpush2.bf16.msra.mxu0 0
        %1440 = vmatprep.mubr.bf16.mxu0 0
        %1441 = vmatmul.mubr.bf16.gmra.mxu0 %v703
        %v1442 = vpop.f32.mrf.mxu0
        %v1443 = vadd.f32 %v1394, %v1442
        %v1444 = vpop.f32.mrf.mxu0
        %v1445 = vpop.f32.mrf.mxu0
        %v1446 = vpop.f32.mrf.mxu0
        %1447 = vdwg.mxu0
        %v1448 = vpack.c.bf16 %v1313, %v1313
        %v1449 = vpack.c.bf16 %v1378, %v1378
        %v1451 = vsel %vm747, %v1448, 0
        %v1454 = vsel %vm747, %v1449, 0
        %1456 = vmatprep.subr.bf16.mxu0 0
        %1457 = vmatpush1.bf16.xpose.msra.mxu0 0
        %1458 = vmatprep.subr.bf16.mxu0 0
        %1459 = vmatpush1.bf16.xpose.msra.mxu0 0
        %1460 = vmatprep.subr.bf16.mxu0 0
        %1461 = vmatpush1.bf16.xpose.msra.mxu0 0
        %1462 = vmatprep.subr.bf16.mxu0 0
        %1463 = vmatpush1.bf16.xpose.msra.mxu0 0
        %1464 = vmatprep.subr.bf16.mxu0 0
        %1465 = vmatpush1.bf16.xpose.msra.mxu0 0
        %1466 = vmatprep.subr.bf16.mxu0 0
        %1467 = vmatpush1.bf16.xpose.msra.mxu0 0
        %1468 = vmatprep.subr.bf16.mxu0 0
        %1469 = vmatpush1.bf16.xpose.msra.mxu0 0
        %1470 = vmatprep.subr.bf16.mxu0 0
        %1471 = vmatpush1.bf16.xpose.msra.mxu0 %v1454
        %1472 = vmatprep.subr.bf16.mxu0 0
        %1473 = vmatpush2.bf16.xpose.msra.mxu0 0
        %1474 = vmatprep.subr.bf16.mxu0 0
        %1475 = vmatpush2.bf16.xpose.msra.mxu0 0
        %1476 = vmatprep.subr.bf16.mxu0 0
        %1477 = vmatpush2.bf16.xpose.msra.mxu0 0
        %1478 = vmatprep.subr.bf16.mxu0 0
        %1479 = vmatpush2.bf16.xpose.msra.mxu0 0
        %1480 = vmatprep.subr.bf16.mxu0 0
        %1481 = vmatpush2.bf16.xpose.msra.mxu0 0
        %1482 = vmatprep.subr.bf16.mxu0 0
        %1483 = vmatpush2.bf16.xpose.msra.mxu0 0
        %1484 = vmatprep.subr.bf16.mxu0 0
        %1485 = vmatpush2.bf16.xpose.msra.mxu0 0
        %1486 = vmatprep.subr.bf16.mxu0 0
        %1487 = vmatpush2.bf16.xpose.msra.mxu0 0
        %1488 = vmatprep.mubr.bf16.mxu0 0
        %1489 = vmatmul.mubr.bf16.gmra.mxu0 %v1451
        %v1490 = vpop.f32.mrf.mxu0
        %v1491 = vadd.f32 %v545, %v1490
        %v1492 = vpop.f32.mrf.mxu0
        %v1493 = vpop.f32.mrf.mxu0
        %v1494 = vpop.f32.mrf.mxu0
        %1495 = vdwg.mxu0
        %v1496 = vsel %vm747, %v1491, -inf
        %1497 = vmax.xlane.f32.xlu0 %v1496
        %v1498 = vpop.xlane.xlu0 %1497
        %v1499 = vsub.f32 %v1491, %v1498
        %v1500 = vmul.f32 %v1499, 1.442695
        %v1501 = vpow.pop %v1500
        %v1502 = vsel %vm747, %v1501, 0.0
        %1503 = vadd.xlane.f32.xlu0 %v1502
        %v1504 = vpop.xlane.xlu0 %1503
        %v1505 = vrcp.pop %v1504
        %v1506 = vmul.f32 %v1501, %v1505
        %v1507 = vpack.c.bf16 %v1506, %v1506
        %v1508 = vpack.c.bf16 %v1443, %v1443
        %v1510 = vsel %vm747, %v1507, 0
        %v1513 = vsel %vm810, %v1508, 0
        %1515 = vmatprep.subr.bf16.mxu0 0
        %1516 = vmatpush1.bf16.msra.mxu0 0
        %1517 = vmatprep.subr.bf16.mxu0 0
        %1518 = vmatpush1.bf16.msra.mxu0 0
        %1519 = vmatprep.subr.bf16.mxu0 0
        %1520 = vmatpush1.bf16.msra.mxu0 0
        %1521 = vmatprep.subr.bf16.mxu0 0
        %1522 = vmatpush1.bf16.msra.mxu0 0
        %1523 = vmatprep.subr.bf16.mxu0 0
        %1524 = vmatpush1.bf16.msra.mxu0 0
        %1525 = vmatprep.subr.bf16.mxu0 0
        %1526 = vmatpush1.bf16.msra.mxu0 0
        %1527 = vmatprep.subr.bf16.mxu0 0
        %1528 = vmatpush1.bf16.msra.mxu0 0
        %1529 = vmatprep.subr.bf16.mxu0 0
        %1530 = vmatpush1.bf16.msra.mxu0 %v1513
        %1531 = vmatprep.subr.bf16.mxu0 0
        %1532 = vmatpush2.bf16.msra.mxu0 0
        %1533 = vmatprep.subr.bf16.mxu0 0
        %1534 = vmatpush2.bf16.msra.mxu0 0
        %1535 = vmatprep.subr.bf16.mxu0 0
        %1536 = vmatpush2.bf16.msra.mxu0 0
        %1537 = vmatprep.subr.bf16.mxu0 0
        %1538 = vmatpush2.bf16.msra.mxu0 0
        %1539 = vmatprep.subr.bf16.mxu0 0
        %1540 = vmatpush2.bf16.msra.mxu0 0
        %1541 = vmatprep.subr.bf16.mxu0 0
        %1542 = vmatpush2.bf16.msra.mxu0 0
        %1543 = vmatprep.subr.bf16.mxu0 0
        %1544 = vmatpush2.bf16.msra.mxu0 0
        %1545 = vmatprep.subr.bf16.mxu0 0
        %1546 = vmatpush2.bf16.msra.mxu0 0
        %1547 = vmatprep.mubr.bf16.mxu0 0
        %1548 = vmatmul.mubr.bf16.gmra.mxu0 %v1510
        %v1549 = vpop.f32.mrf.mxu0
        %v1550 = vadd.f32 0.0, %v1549
        %v1551 = vpop.f32.mrf.mxu0
        %v1552 = vpop.f32.mrf.mxu0
        %v1553 = vpop.f32.mrf.mxu0
        %1554 = vdwg.mxu0
        %v1555 = vpack.c.bf16 %v1550, %v1550
        %s1556 = scalar_lea.vmem %s11, 8
        %v1557 = vld [vmem:[%s1556] sm:$0xf]
        %v1559 = vsel %vm747, %v1555, 0
        %v1562 = vsel %vm810, %v1557, 0
        %1564 = vmatprep.subr.bf16.mxu0 0
        %1565 = vmatpush1.bf16.msra.mxu0 0
        %1566 = vmatprep.subr.bf16.mxu0 0
        %1567 = vmatpush1.bf16.msra.mxu0 0
        %1568 = vmatprep.subr.bf16.mxu0 0
        %1569 = vmatpush1.bf16.msra.mxu0 0
        %1570 = vmatprep.subr.bf16.mxu0 0
        %1571 = vmatpush1.bf16.msra.mxu0 0
        %1572 = vmatprep.subr.bf16.mxu0 0
        %1573 = vmatpush1.bf16.msra.mxu0 0
        %1574 = vmatprep.subr.bf16.mxu0 0
        %1575 = vmatpush1.bf16.msra.mxu0 0
        %1576 = vmatprep.subr.bf16.mxu0 0
        %1577 = vmatpush1.bf16.msra.mxu0 0
        %1578 = vmatprep.subr.bf16.mxu0 0
        %1579 = vmatpush1.bf16.msra.mxu0 %v1562
        %1580 = vmatprep.subr.bf16.mxu0 0
        %1581 = vmatpush2.bf16.msra.mxu0 0
        %1582 = vmatprep.subr.bf16.mxu0 0
        %1583 = vmatpush2.bf16.msra.mxu0 0
        %1584 = vmatprep.subr.bf16.mxu0 0
        %1585 = vmatpush2.bf16.msra.mxu0 0
        %1586 = vmatprep.subr.bf16.mxu0 0
        %1587 = vmatpush2.bf16.msra.mxu0 0
        %1588 = vmatprep.subr.bf16.mxu0 0
        %1589 = vmatpush2.bf16.msra.mxu0 0
        %1590 = vmatprep.subr.bf16.mxu0 0
        %1591 = vmatpush2.bf16.msra.mxu0 0
        %1592 = vmatprep.subr.bf16.mxu0 0
        %1593 = vmatpush2.bf16.msra.mxu0 0
        %1594 = vmatprep.subr.bf16.mxu0 0
        %1595 = vmatpush2.bf16.msra.mxu0 0
        %1596 = vmatprep.mubr.bf16.mxu0 0
        %1597 = vmatmul.mubr.bf16.gmra.mxu0 %v1559
        %v1598 = vpop.f32.mrf.mxu0
        %v1599 = vadd.f32 0.0, %v1598
        %v1600 = vpop.f32.mrf.mxu0
        %v1601 = vpop.f32.mrf.mxu0
        %v1602 = vpop.f32.mrf.mxu0
        %1603 = vdwg.mxu0
        %v1604 = vadd.f32 %v1248, %v1599
        %s1605 = scalar_lea.vmem %s5, 48
        %v1606 = vld [vmem:[%s1605] sm:$0xf]
        %v1607 = vld [vmem:[%s1605 + $0x4] sm:$0xf]
        %v1608 = vld [vmem:[%s1605 + $0x8] sm:$0xf]
        %v1609 = vld [vmem:[%s1605 + $0xc] sm:$0xf]
        %s1610 = scalar_lea.vmem %s6, 3
        %v1611 = vld [vmem:[%s1610] sm:$0x1]
        %v1613 = vlaneseq
        %v1614 = vshrl.u32 %v1613, 7
        %v1615 = vsub.s32 0, %v1614
        %v1616 = vrot.slane %v1611, %v1615
        %v1622 = vunpack.c.l.b16 %v1606
        %v1623 = vunpack.c.l.b16 %v1607
        %v1624 = vunpack.c.l.b16 %v1608
        %v1625 = vunpack.c.l.b16 %v1609
        %v1626 = vpack.c.b16 %v1623, %v1622
        %v1627 = vpack.c.b16 %v1625, %v1624
        %1630 = vmatprep.subr.bf16.mxu0 0
        %1631 = vmatpush1.bf16.msra.mxu0 0
        %1632 = vmatprep.subr.bf16.mxu0 0
        %1633 = vmatpush1.bf16.msra.mxu0 0
        %1634 = vmatprep.subr.bf16.mxu0 0
        %1635 = vmatpush1.bf16.msra.mxu0 0
        %1636 = vmatprep.subr.bf16.mxu0 0
        %1637 = vmatpush1.bf16.msra.mxu0 0
        %1638 = vmatprep.subr.bf16.mxu0 0
        %1639 = vmatpush1.bf16.msra.mxu0 0
        %1640 = vmatprep.subr.bf16.mxu0 0
        %1641 = vmatpush1.bf16.msra.mxu0 0
        %1642 = vmatprep.subr.bf16.mxu0 0
        %1643 = vmatpush1.bf16.msra.mxu0 %v1627
        %1644 = vmatprep.subr.bf16.mxu0 0
        %1645 = vmatpush1.bf16.msra.mxu0 %v1626
        %1646 = vmatprep.subr.bf16.mxu0 0
        %1647 = vmatpush2.bf16.msra.mxu0 0
        %1648 = vmatprep.subr.bf16.mxu0 0
        %1649 = vmatpush2.bf16.msra.mxu0 0
        %1650 = vmatprep.subr.bf16.mxu0 0
        %1651 = vmatpush2.bf16.msra.mxu0 0
        %1652 = vmatprep.subr.bf16.mxu0 0
        %1653 = vmatpush2.bf16.msra.mxu0 0
        %1654 = vmatprep.subr.bf16.mxu0 0
        %1655 = vmatpush2.bf16.msra.mxu0 0
        %1656 = vmatprep.subr.bf16.mxu0 0
        %1657 = vmatpush2.bf16.msra.mxu0 0
        %1658 = vmatprep.subr.bf16.mxu0 0
        %1659 = vmatpush2.bf16.msra.mxu0 0
        %1660 = vmatprep.subr.bf16.mxu0 0
        %1661 = vmatpush2.bf16.msra.mxu0 0
        %1662 = vmatprep.mubr.bf16.mxu0 0
        %1663 = vmatmul.mubr.bf16.gmra.mxu0 %v571
        %v1664 = vpop.f32.mrf.mxu0
        %v1665 = vadd.f32 %v1616, %v1664
        %v1666 = vpop.f32.mrf.mxu0
        %v1667 = vpop.f32.mrf.mxu0
        %v1668 = vpop.f32.mrf.mxu0
        %1669 = vdwg.mxu0
        %s1670 = scalar_lea.vmem %s7, 48
        %v1671 = vld [vmem:[%s1670] sm:$0xf]
        %v1672 = vld [vmem:[%s1670 + $0x4] sm:$0xf]
        %v1673 = vld [vmem:[%s1670 + $0x8] sm:$0xf]
        %v1674 = vld [vmem:[%s1670 + $0xc] sm:$0xf]
        %s1675 = scalar_lea.vmem %s8, 3
        %v1676 = vld [vmem:[%s1675] sm:$0x1]
        %v1678 = vlaneseq
        %v1679 = vshrl.u32 %v1678, 7
        %v1680 = vsub.s32 0, %v1679
        %v1681 = vrot.slane %v1676, %v1680
        %v1687 = vunpack.c.l.b16 %v1671
        %v1688 = vunpack.c.l.b16 %v1672
        %v1689 = vunpack.c.l.b16 %v1673
        %v1690 = vunpack.c.l.b16 %v1674
        %v1691 = vpack.c.b16 %v1688, %v1687
        %v1692 = vpack.c.b16 %v1690, %v1689
        %1695 = vmatprep.subr.bf16.mxu0 0
        %1696 = vmatpush1.bf16.msra.mxu0 0
        %1697 = vmatprep.subr.bf16.mxu0 0
        %1698 = vmatpush1.bf16.msra.mxu0 0
        %1699 = vmatprep.subr.bf16.mxu0 0
        %1700 = vmatpush1.bf16.msra.mxu0 0
        %1701 = vmatprep.subr.bf16.mxu0 0
        %1702 = vmatpush1.bf16.msra.mxu0 0
        %1703 = vmatprep.subr.bf16.mxu0 0
        %1704 = vmatpush1.bf16.msra.mxu0 0
        %1705 = vmatprep.subr.bf16.mxu0 0
        %1706 = vmatpush1.bf16.msra.mxu0 0
        %1707 = vmatprep.subr.bf16.mxu0 0
        %1708 = vmatpush1.bf16.msra.mxu0 %v1692
        %1709 = vmatprep.subr.bf16.mxu0 0
        %1710 = vmatpush1.bf16.msra.mxu0 %v1691
        %1711 = vmatprep.subr.bf16.mxu0 0
        %1712 = vmatpush2.bf16.msra.mxu0 0
        %1713 = vmatprep.subr.bf16.mxu0 0
        %1714 = vmatpush2.bf16.msra.mxu0 0
        %1715 = vmatprep.subr.bf16.mxu0 0
        %1716 = vmatpush2.bf16.msra.mxu0 0
        %1717 = vmatprep.subr.bf16.mxu0 0
        %1718 = vmatpush2.bf16.msra.mxu0 0
        %1719 = vmatprep.subr.bf16.mxu0 0
        %1720 = vmatpush2.bf16.msra.mxu0 0
        %1721 = vmatprep.subr.bf16.mxu0 0
        %1722 = vmatpush2.bf16.msra.mxu0 0
        %1723 = vmatprep.subr.bf16.mxu0 0
        %1724 = vmatpush2.bf16.msra.mxu0 0
        %1725 = vmatprep.subr.bf16.mxu0 0
        %1726 = vmatpush2.bf16.msra.mxu0 0
        %1727 = vmatprep.mubr.bf16.mxu0 0
        %1728 = vmatmul.mubr.bf16.gmra.mxu0 %v637
        %v1729 = vpop.f32.mrf.mxu0
        %v1730 = vadd.f32 %v1681, %v1729
        %v1731 = vpop.f32.mrf.mxu0
        %v1732 = vpop.f32.mrf.mxu0
        %v1733 = vpop.f32.mrf.mxu0
        %1734 = vdwg.mxu0
        %s1735 = scalar_lea.vmem %s9, 48
        %v1736 = vld [vmem:[%s1735] sm:$0xf]
        %v1737 = vld [vmem:[%s1735 + $0x4] sm:$0xf]
        %v1738 = vld [vmem:[%s1735 + $0x8] sm:$0xf]
        %v1739 = vld [vmem:[%s1735 + $0xc] sm:$0xf]
        %s1740 = scalar_lea.vmem %s10, 3
        %v1741 = vld [vmem:[%s1740] sm:$0x1]
        %v1743 = vlaneseq
        %v1744 = vshrl.u32 %v1743, 7
        %v1745 = vsub.s32 0, %v1744
        %v1746 = vrot.slane %v1741, %v1745
        %v1752 = vunpack.c.l.b16 %v1736
        %v1753 = vunpack.c.l.b16 %v1737
        %v1754 = vunpack.c.l.b16 %v1738
        %v1755 = vunpack.c.l.b16 %v1739
        %v1756 = vpack.c.b16 %v1753, %v1752
        %v1757 = vpack.c.b16 %v1755, %v1754
        %1760 = vmatprep.subr.bf16.mxu0 0
        %1761 = vmatpush1.bf16.msra.mxu0 0
        %1762 = vmatprep.subr.bf16.mxu0 0
        %1763 = vmatpush1.bf16.msra.mxu0 0
        %1764 = vmatprep.subr.bf16.mxu0 0
        %1765 = vmatpush1.bf16.msra.mxu0 0
        %1766 = vmatprep.subr.bf16.mxu0 0
        %1767 = vmatpush1.bf16.msra.mxu0 0
        %1768 = vmatprep.subr.bf16.mxu0 0
        %1769 = vmatpush1.bf16.msra.mxu0 0
        %1770 = vmatprep.subr.bf16.mxu0 0
        %1771 = vmatpush1.bf16.msra.mxu0 0
        %1772 = vmatprep.subr.bf16.mxu0 0
        %1773 = vmatpush1.bf16.msra.mxu0 %v1757
        %1774 = vmatprep.subr.bf16.mxu0 0
        %1775 = vmatpush1.bf16.msra.mxu0 %v1756
        %1776 = vmatprep.subr.bf16.mxu0 0
        %1777 = vmatpush2.bf16.msra.mxu0 0
        %1778 = vmatprep.subr.bf16.mxu0 0
        %1779 = vmatpush2.bf16.msra.mxu0 0
        %1780 = vmatprep.subr.bf16.mxu0 0
        %1781 = vmatpush2.bf16.msra.mxu0 0
        %1782 = vmatprep.subr.bf16.mxu0 0
        %1783 = vmatpush2.bf16.msra.mxu0 0
        %1784 = vmatprep.subr.bf16.mxu0 0
        %1785 = vmatpush2.bf16.msra.mxu0 0
        %1786 = vmatprep.subr.bf16.mxu0 0
        %1787 = vmatpush2.bf16.msra.mxu0 0
        %1788 = vmatprep.subr.bf16.mxu0 0
        %1789 = vmatpush2.bf16.msra.mxu0 0
        %1790 = vmatprep.subr.bf16.mxu0 0
        %1791 = vmatpush2.bf16.msra.mxu0 0
        %1792 = vmatprep.mubr.bf16.mxu0 0
        %1793 = vmatmul.mubr.bf16.gmra.mxu0 %v703
        %v1794 = vpop.f32.mrf.mxu0
        %v1795 = vadd.f32 %v1746, %v1794
        %v1796 = vpop.f32.mrf.mxu0
        %v1797 = vpop.f32.mrf.mxu0
        %v1798 = vpop.f32.mrf.mxu0
        %1799 = vdwg.mxu0
        %v1800 = vpack.c.bf16 %v1665, %v1665
        %v1801 = vpack.c.bf16 %v1730, %v1730
        %v1803 = vsel %vm747, %v1800, 0
        %v1806 = vsel %vm747, %v1801, 0
        %1808 = vmatprep.subr.bf16.mxu0 0
        %1809 = vmatpush1.bf16.xpose.msra.mxu0 0
        %1810 = vmatprep.subr.bf16.mxu0 0
        %1811 = vmatpush1.bf16.xpose.msra.mxu0 0
        %1812 = vmatprep.subr.bf16.mxu0 0
        %1813 = vmatpush1.bf16.xpose.msra.mxu0 0
        %1814 = vmatprep.subr.bf16.mxu0 0
        %1815 = vmatpush1.bf16.xpose.msra.mxu0 0
        %1816 = vmatprep.subr.bf16.mxu0 0
        %1817 = vmatpush1.bf16.xpose.msra.mxu0 0
        %1818 = vmatprep.subr.bf16.mxu0 0
        %1819 = vmatpush1.bf16.xpose.msra.mxu0 0
        %1820 = vmatprep.subr.bf16.mxu0 0
        %1821 = vmatpush1.bf16.xpose.msra.mxu0 0
        %1822 = vmatprep.subr.bf16.mxu0 0
        %1823 = vmatpush1.bf16.xpose.msra.mxu0 %v1806
        %1824 = vmatprep.subr.bf16.mxu0 0
        %1825 = vmatpush2.bf16.xpose.msra.mxu0 0
        %1826 = vmatprep.subr.bf16.mxu0 0
        %1827 = vmatpush2.bf16.xpose.msra.mxu0 0
        %1828 = vmatprep.subr.bf16.mxu0 0
        %1829 = vmatpush2.bf16.xpose.msra.mxu0 0
        %1830 = vmatprep.subr.bf16.mxu0 0
        %1831 = vmatpush2.bf16.xpose.msra.mxu0 0
        %1832 = vmatprep.subr.bf16.mxu0 0
        %1833 = vmatpush2.bf16.xpose.msra.mxu0 0
        %1834 = vmatprep.subr.bf16.mxu0 0
        %1835 = vmatpush2.bf16.xpose.msra.mxu0 0
        %1836 = vmatprep.subr.bf16.mxu0 0
        %1837 = vmatpush2.bf16.xpose.msra.mxu0 0
        %1838 = vmatprep.subr.bf16.mxu0 0
        %1839 = vmatpush2.bf16.xpose.msra.mxu0 0
        %1840 = vmatprep.mubr.bf16.mxu0 0
        %1841 = vmatmul.mubr.bf16.gmra.mxu0 %v1803
        %v1842 = vpop.f32.mrf.mxu0
        %v1843 = vadd.f32 %v545, %v1842
        %v1844 = vpop.f32.mrf.mxu0
        %v1845 = vpop.f32.mrf.mxu0
        %v1846 = vpop.f32.mrf.mxu0
        %1847 = vdwg.mxu0
        %v1848 = vsel %vm747, %v1843, -inf
        %1849 = vmax.xlane.f32.xlu0 %v1848
        %v1850 = vpop.xlane.xlu0 %1849
        %v1851 = vsub.f32 %v1843, %v1850
        %v1852 = vmul.f32 %v1851, 1.442695
        %v1853 = vpow.pop %v1852
        %v1854 = vsel %vm747, %v1853, 0.0
        %1855 = vadd.xlane.f32.xlu0 %v1854
        %v1856 = vpop.xlane.xlu0 %1855
        %v1857 = vrcp.pop %v1856
        %v1858 = vmul.f32 %v1853, %v1857
        %v1859 = vpack.c.bf16 %v1858, %v1858
        %v1860 = vpack.c.bf16 %v1795, %v1795
        %v1862 = vsel %vm747, %v1859, 0
        %v1865 = vsel %vm810, %v1860, 0
        %1867 = vmatprep.subr.bf16.mxu0 0
        %1868 = vmatpush1.bf16.msra.mxu0 0
        %1869 = vmatprep.subr.bf16.mxu0 0
        %1870 = vmatpush1.bf16.msra.mxu0 0
        %1871 = vmatprep.subr.bf16.mxu0 0
        %1872 = vmatpush1.bf16.msra.mxu0 0
        %1873 = vmatprep.subr.bf16.mxu0 0
        %1874 = vmatpush1.bf16.msra.mxu0 0
        %1875 = vmatprep.subr.bf16.mxu0 0
        %1876 = vmatpush1.bf16.msra.mxu0 0
        %1877 = vmatprep.subr.bf16.mxu0 0
        %1878 = vmatpush1.bf16.msra.mxu0 0
        %1879 = vmatprep.subr.bf16.mxu0 0
        %1880 = vmatpush1.bf16.msra.mxu0 0
        %1881 = vmatprep.subr.bf16.mxu0 0
        %1882 = vmatpush1.bf16.msra.mxu0 %v1865
        %1883 = vmatprep.subr.bf16.mxu0 0
        %1884 = vmatpush2.bf16.msra.mxu0 0
        %1885 = vmatprep.subr.bf16.mxu0 0
        %1886 = vmatpush2.bf16.msra.mxu0 0
        %1887 = vmatprep.subr.bf16.mxu0 0
        %1888 = vmatpush2.bf16.msra.mxu0 0
        %1889 = vmatprep.subr.bf16.mxu0 0
        %1890 = vmatpush2.bf16.msra.mxu0 0
        %1891 = vmatprep.subr.bf16.mxu0 0
        %1892 = vmatpush2.bf16.msra.mxu0 0
        %1893 = vmatprep.subr.bf16.mxu0 0
        %1894 = vmatpush2.bf16.msra.mxu0 0
        %1895 = vmatprep.subr.bf16.mxu0 0
        %1896 = vmatpush2.bf16.msra.mxu0 0
        %1897 = vmatprep.subr.bf16.mxu0 0
        %1898 = vmatpush2.bf16.msra.mxu0 0
        %1899 = vmatprep.mubr.bf16.mxu0 0
        %1900 = vmatmul.mubr.bf16.gmra.mxu0 %v1862
        %v1901 = vpop.f32.mrf.mxu0
        %v1902 = vadd.f32 0.0, %v1901
        %v1903 = vpop.f32.mrf.mxu0
        %v1904 = vpop.f32.mrf.mxu0
        %v1905 = vpop.f32.mrf.mxu0
        %1906 = vdwg.mxu0
        %v1907 = vpack.c.bf16 %v1902, %v1902
        %s1908 = scalar_lea.vmem %s11, 12
        %v1909 = vld [vmem:[%s1908] sm:$0xf]
        %v1911 = vsel %vm747, %v1907, 0
        %v1914 = vsel %vm810, %v1909, 0
        %1916 = vmatprep.subr.bf16.mxu0 0
        %1917 = vmatpush1.bf16.msra.mxu0 0
        %1918 = vmatprep.subr.bf16.mxu0 0
        %1919 = vmatpush1.bf16.msra.mxu0 0
        %1920 = vmatprep.subr.bf16.mxu0 0
        %1921 = vmatpush1.bf16.msra.mxu0 0
        %1922 = vmatprep.subr.bf16.mxu0 0
        %1923 = vmatpush1.bf16.msra.mxu0 0
        %1924 = vmatprep.subr.bf16.mxu0 0
        %1925 = vmatpush1.bf16.msra.mxu0 0
        %1926 = vmatprep.subr.bf16.mxu0 0
        %1927 = vmatpush1.bf16.msra.mxu0 0
        %1928 = vmatprep.subr.bf16.mxu0 0
        %1929 = vmatpush1.bf16.msra.mxu0 0
        %1930 = vmatprep.subr.bf16.mxu0 0
        %1931 = vmatpush1.bf16.msra.mxu0 %v1914
        %1932 = vmatprep.subr.bf16.mxu0 0
        %1933 = vmatpush2.bf16.msra.mxu0 0
        %1934 = vmatprep.subr.bf16.mxu0 0
        %1935 = vmatpush2.bf16.msra.mxu0 0
        %1936 = vmatprep.subr.bf16.mxu0 0
        %1937 = vmatpush2.bf16.msra.mxu0 0
        %1938 = vmatprep.subr.bf16.mxu0 0
        %1939 = vmatpush2.bf16.msra.mxu0 0
        %1940 = vmatprep.subr.bf16.mxu0 0
        %1941 = vmatpush2.bf16.msra.mxu0 0
        %1942 = vmatprep.subr.bf16.mxu0 0
        %1943 = vmatpush2.bf16.msra.mxu0 0
        %1944 = vmatprep.subr.bf16.mxu0 0
        %1945 = vmatpush2.bf16.msra.mxu0 0
        %1946 = vmatprep.subr.bf16.mxu0 0
        %1947 = vmatpush2.bf16.msra.mxu0 0
        %1948 = vmatprep.mubr.bf16.mxu0 0
        %1949 = vmatmul.mubr.bf16.gmra.mxu0 %v1911
        %v1950 = vpop.f32.mrf.mxu0
        %v1951 = vadd.f32 0.0, %v1950
        %v1952 = vpop.f32.mrf.mxu0
        %v1953 = vpop.f32.mrf.mxu0
        %v1954 = vpop.f32.mrf.mxu0
        %1955 = vdwg.mxu0
        %v1956 = vadd.f32 %v1604, %v1951
        %v1957 = vld [vmem:[%s12] sm:$0x1]
        %v1959 = vlaneseq
        %v1960 = vshrl.u32 %v1959, 7
        %v1961 = vsub.s32 0, %v1960
        %v1962 = vrot.slane %v1957, %v1961
        %v1964 = vadd.f32 %v1956, %v1962
        %1965 = vst.msk [vmem:[%s503] sm:$0xff] %vm569, %v1964
        %s1966 = sand.u32 %s349, 1
        %s1967 = scalar_lea.sflag [#allocation3], %s1966
        %s1968 = sand.u32 %s349, 1
        %s1969 = smul.addr %s1968, 8
        %s1970 = scalar_lea.vmem [#allocation2], %s1969
        // Predicated region
        $region73: #{tpu_custom_call.1} parent=71 // pred_check
          %p1971 = pneg %p359
        $region74: #{tpu_custom_call.1} parent=71 // pred_check_branch
          %1973 = sbr.rel (%p1971) target = $region76
        $region75: #{tpu_custom_call.1} parent=71 // pred_region
          %s1975 = ssub.s32 128, 128
          %1976 = vsyncadd %s1967, %s1975
          %s1977 = sadd.s32 %s32, %s31
          %s1978 = smul.addr %s1977, 128
          %s1979 = scalar_lea.hbm %s13, %s1978
          %s1981 = sshll.u32 %s1970, 4
          %s1982 = int_to_ptr.vmem [resolvable:$true] %s1981
          %1984 = dma.vmem_to_hbm [thread:$0]  %s1982, 128, %s1979, %s1967
        $region76: #{tpu_custom_call.1} parent=71 // pred_fallthru
          _
      $region72: #{tpu_custom_call.1} parent=5 // pred_fallthru
        _
      %p1985 = scmp.le.s32.totalorder 2, %s22
      // Predicated region
      $region77: #{tpu_custom_call.1} parent=5 // pred_check
        %p1986 = pneg %p1985
      $region78: #{tpu_custom_call.1} parent=5 // pred_check_branch
        %1988 = sbr.rel (%p1986) target = $region80
      $region79: #{tpu_custom_call.1} parent=5 // pred_region
        %s1989 = ssub.s32 %s22, 2
        // Predicated region
        $region81: #{tpu_custom_call.1} parent=79 // pred_check
          %p1990 = pneg %p365
        $region82: #{tpu_custom_call.1} parent=79 // pred_check_branch
          %1992 = sbr.rel (%p1990) target = $region84
        $region83: #{tpu_custom_call.1} parent=79 // pred_region
          %s1993 = sand.u32 %s350, 1
          %s1994 = scalar_lea.sflag [#allocation3], %s1993
          %s1995 = sand.u32 %s350, 1
          %s1996 = smul.addr %s1995, 8
          %s1997 = scalar_lea.vmem [#allocation2], %s1996
          %1998 = dma.done %s1994, 128
        $region84: #{tpu_custom_call.1} parent=79 // pred_fallthru
          _
      $region80: #{tpu_custom_call.1} parent=5 // pred_fallthru
        _
    $region6: #{tpu_custom_call.1} parent=1 // loop_footer
      %s26 = sadd.s32 1, %s22
    $region7: #{tpu_custom_call.1} parent=1 // loop_footer_branch
      %21 = sbr.rel target = $region3
    $region8: #{tpu_custom_call.1} parent=1 // loop_exit
      _
    %1999 = vsyncpa [#allocation3], 1
    %s2000 = scalar_lea.sflag [#allocation3], 1
    %2001 = vsyncpa %s2000, 1

</llo_original>
